<compile_context>
chip_gen: v7x
topology: tpu7x:2x2x1
jax: 0.10.0
libtpu: 0.0.40
codegen_flags: <defaults>
</compile_context>

<pallas_src>
import jax
import jax.numpy as jnp
import numpy as np
from jax.experimental import pallas as pl
from jax.experimental.pallas import tpu as pltpu

BLOCK_NUM = 3
LEAKY_SLOPE = 0.1
LANE = 128


def _leaky(x):
    # max(x, a*x) == LeakyReLU_a(x) for 0 < a < 1 (2 VALU ops instead of 3).
    return jnp.maximum(x, LEAKY_SLOPE * x)


# ----------------------------------------------------------------------------- #
# Kernel
# ----------------------------------------------------------------------------- #
def mlp_resblock_kernel(x_ref,
                        in_w_ref, in_b_ref,
                        w1_ref, b1_ref, w2_ref, b2_ref,
                        ow1_ref, ob1_ref, ow2_ref, ob2_ref,
                        o_ref):
    bf16 = jnp.bfloat16
    # x arrives unpadded f32 (tile_m, in_ch); cast to bf16 in-register.
    x = x_ref[...].astype(bf16)

    # in_mlp: Linear(in_ch, ch) + LeakyReLU(0.1)   (f32 accumulation)
    h = jnp.dot(x, in_w_ref[...], preferred_element_type=jnp.float32) + in_b_ref[...]
    h = _leaky(h)

    # residual blocks: Linear -> LeakyReLU -> Linear, +residual, LeakyReLU
    for i in range(BLOCK_NUM):
        h0 = h
        t = jnp.dot(h.astype(bf16), w1_ref[i],
                    preferred_element_type=jnp.float32) + b1_ref[i]
        t = _leaky(t)
        t = jnp.dot(t.astype(bf16), w2_ref[i],
                    preferred_element_type=jnp.float32) + b2_ref[i]
        h = _leaky(t + h0)

    # out_mlp: Linear(ch, ch) -> LeakyReLU -> Linear(ch, out_ch)
    t = jnp.dot(h.astype(bf16), ow1_ref[...],
                preferred_element_type=jnp.float32) + ob1_ref[...]
    t = _leaky(t)
    t = jnp.dot(t.astype(bf16), ow2_ref[...],
                preferred_element_type=jnp.float32) + ob2_ref[...]

    # final ReLU; output block is exactly (tile_m, out_ch) — no padded lanes written.
    o_ref[...] = jnp.maximum(t, 0.0)


# ----------------------------------------------------------------------------- #
# Parameter preparation (ONE-TIME — do not call per forward)
# ----------------------------------------------------------------------------- #
def _round_up(n, m):
    return ((n + m - 1) // m) * m


def _pad_axis(a, target, axis):
    pad = target - a.shape[axis]
    if pad <= 0:
        return a
    widths = [(0, 0)] * a.ndim
    widths[axis] = (0, pad)
    return jnp.pad(a, widths)


def prepare_params(p):
    """Pad hidden-channel dims to 128 lanes and cast matmul operands to bf16.
    Call once and cache the result; the forward wrapper does no array prep."""
    ch = p["in_w"].shape[1]
    Pch = _round_up(ch, LANE)
    bf16 = jnp.bfloat16
    prep = dict(
        in_w=_pad_axis(p["in_w"], Pch, 1).astype(bf16),               # (in_ch, Pch)
        in_b=_pad_axis(p["in_b"], Pch, 1).astype(jnp.float32),        # (1, Pch)
        w1=_pad_axis(_pad_axis(p["w1"], Pch, 1), Pch, 2).astype(bf16),   # (B#, Pch, Pch)
        b1=_pad_axis(p["b1"], Pch, 2).astype(jnp.float32),               # (B#, 1, Pch)
        w2=_pad_axis(_pad_axis(p["w2"], Pch, 1), Pch, 2).astype(bf16),
        b2=_pad_axis(p["b2"], Pch, 2).astype(jnp.float32),
        ow1=_pad_axis(_pad_axis(p["ow1"], Pch, 0), Pch, 1).astype(bf16),  # (Pch, Pch)
        ob1=_pad_axis(p["ob1"], Pch, 1).astype(jnp.float32),              # (1, Pch)
        ow2=_pad_axis(p["ow2"], Pch, 0).astype(bf16),                 # (Pch, out_ch)
        ob2=p["ob2"].astype(jnp.float32),                             # (1, out_ch)
    )
    # Materialize on device once so repeated forwards reuse the same buffers.
    return {k: jax.device_put(v) for k, v in prep.items()}


# ----------------------------------------------------------------------------- #
# Tiling policy
# ----------------------------------------------------------------------------- #
def _detect_num_tensorcores():
    try:
        kind = jax.devices()[0].device_kind.lower()
        if "v7" in kind or "7x" in kind:
            return 2          # v7x: 2 TensorCores per chip share the grid
    except Exception:
        pass
    return 1


def _pick_tile_m(B, max_tile=512):
    """Largest multiple-of-8 divisor of B (<= max_tile) with >=2 grid steps per
    TensorCore, without shrinking below 256 rows for large batches."""
    def best(min_steps, min_tile):
        cands = [t for t in range(min_tile, min(B, max_tile) + 1, 8)
                 if B % t == 0 and B // t >= min_steps]
        return max(cands) if cands else None

    cores = _detect_num_tensorcores()
    for min_steps, min_tile in ((2 * cores, 256 if B >= 512 else 8),
                                (2, 8),
                                (1, 8)):
        t = best(min_steps, min_tile)
        if t is not None:
            return t
    return B   # B not a multiple of 8: single full-height block (legal: == full dim)


# ----------------------------------------------------------------------------- #
# Forward wrapper (hot path: pallas_call only)
# ----------------------------------------------------------------------------- #
def mlp_resblock_relu(x, prep, *, tile_m=None):
    """x: (B, in_ch) float32. prep: output of prepare_params (cached)."""
    B, in_ch = x.shape
    Pch = prep["in_w"].shape[1]
    out_ch = prep["ow2"].shape[1]

    if tile_m is None:
        tile_m = _pick_tile_m(B)
    assert B % tile_m == 0

    grid = (B // tile_m,)
    const2 = lambda i: (0, 0)
    const3 = lambda i: (0, 0, 0)

    in_specs = [
        pl.BlockSpec((tile_m, in_ch), lambda i: (i, 0)),        # x: unpadded last dim
        pl.BlockSpec((in_ch, Pch), const2),
        pl.BlockSpec((1, Pch), const2),
        pl.BlockSpec((BLOCK_NUM, Pch, Pch), const3),
        pl.BlockSpec((BLOCK_NUM, 1, Pch), const3),
        pl.BlockSpec((BLOCK_NUM, Pch, Pch), const3),
        pl.BlockSpec((BLOCK_NUM, 1, Pch), const3),
        pl.BlockSpec((Pch, Pch), const2),
        pl.BlockSpec((1, Pch), const2),
        pl.BlockSpec((Pch, out_ch), const2),
        pl.BlockSpec((1, out_ch), const2),
    ]
    out_spec = pl.BlockSpec((tile_m, out_ch), lambda i: (i, 0))

    # Advisory cost estimate for the XLA scheduler.
    flops = 2 * B * (in_ch * Pch + (2 * BLOCK_NUM + 1) * Pch * Pch + Pch * out_ch)
    weight_bytes = 2 * (prep["in_w"].size + prep["w1"].size + prep["w2"].size
                        + prep["ow1"].size + prep["ow2"].size)
    bias_bytes = 4 * (prep["in_b"].size + prep["b1"].size + prep["b2"].size
                      + prep["ob1"].size + prep["ob2"].size)
    bytes_accessed = 4 * x.size + 4 * B * out_ch + weight_bytes + bias_bytes

    return pl.pallas_call(
        mlp_resblock_kernel,
        out_shape=jax.ShapeDtypeStruct((B, out_ch), jnp.float32),
        grid_spec=pl.GridSpec(grid=grid, in_specs=in_specs, out_specs=out_spec),
        compiler_params=pltpu.CompilerParams(dimension_semantics=("parallel",)),
        cost_estimate=pl.CostEstimate(flops=flops, transcendentals=0,
                                      bytes_accessed=bytes_accessed),
    )(x, prep["in_w"], prep["in_b"],
      prep["w1"], prep["b1"], prep["w2"], prep["b2"],
      prep["ow1"], prep["ob1"], prep["ow2"], prep["ob2"])


# ----------------------------------------------------------------------------- #
# Init + references
# ----------------------------------------------------------------------------- #
def init_params(key, in_ch, ch, out_ch):
    """Deterministic init mimicking nn.Linear's U(-1/sqrt(fan_in), 1/sqrt(fan_in)).
    Weights stored pre-transposed as (in, out)."""
    ks = jax.random.split(key, 16)

    def lin(kw, kb, fan_in, fan_out):
        bound = 1.0 / np.sqrt(fan_in)
        w = jax.random.uniform(kw, (fan_in, fan_out), jnp.float32, -bound, bound)
        b = jax.random.uniform(kb, (1, fan_out), jnp.float32, -bound, bound)
        return w, b

    in_w, in_b = lin(ks[0], ks[1], in_ch, ch)
    w1s, b1s, w2s, b2s = [], [], [], []
    for i in range(BLOCK_NUM):
        w1, b1 = lin(ks[2 + 4 * i], ks[3 + 4 * i], ch, ch)
        w2, b2 = lin(ks[4 + 4 * i], ks[5 + 4 * i], ch, ch)
        w1s.append(w1); b1s.append(b1); w2s.append(w2); b2s.append(b2)
    ow1, ob1 = lin(ks[14], ks[15], ch, ch)
    ow2, ob2 = lin(jax.random.fold_in(key, 100), jax.random.fold_in(key, 101),
                   ch, out_ch)

    return dict(
        in_w=in_w, in_b=in_b,
        w1=jnp.stack(w1s), b1=jnp.stack(b1s),
        w2=jnp.stack(w2s), b2=jnp.stack(b2s),
        ow1=ow1, ob1=ob1, ow2=ow2, ob2=ob2,
    )


def reference_forward(x, p):
    """Pure-JAX f32 reference matching the PyTorch forward exactly."""
    def leaky(v):
        return jnp.where(v > 0, v, LEAKY_SLOPE * v)
    h = leaky(x @ p["in_w"] + p["in_b"])
    for i in range(BLOCK_NUM):
        h0 = h
        t = leaky(h @ p["w1"][i] + p["b1"][i])
        t = t @ p["w2"][i] + p["b2"][i]
        h = leaky(t + h0)
    t = leaky(h @ p["ow1"] + p["ob1"])
    t = t @ p["ow2"] + p["ob2"]
    return jnp.maximum(t, 0.0)


def reference_forward_mixed(x, p):
    """Same structure, bf16 matmul operands / f32 accumulation (kernel precision)."""
    bf = jnp.bfloat16

    def mm(a, w):
        return jnp.dot(a.astype(bf), w.astype(bf), preferred_element_type=jnp.float32)

    def leaky(v):
        return jnp.maximum(v, LEAKY_SLOPE * v)

    h = leaky(mm(x, p["in_w"]) + p["in_b"])
    for i in range(BLOCK_NUM):
        h0 = h
        t = leaky(mm(h, p["w1"][i]) + p["b1"][i])
        t = mm(t, p["w2"][i]) + p["b2"][i]
        h = leaky(t + h0)
    t = leaky(mm(h, p["ow1"]) + p["ob1"])
    t = mm(t, p["ow2"]) + p["ob2"]
    return jnp.maximum(t, 0.0)


# ----------------------------------------------------------------------------- #
if __name__ == "__main__":
    key = jax.random.PRNGKey(0)
    k_x, k_p = jax.random.split(key)

    # Module config: in_ch=16, ch=32, out_ch=8, block_num=3 (small shapes),
    # batch large enough to get >=2 grid steps and exercise pipelining.
    B, in_ch, ch, out_ch = 128, 16, 32, 8
    x = jax.random.normal(k_x, (B, in_ch), jnp.float32)
    params = init_params(k_p, in_ch, ch, out_ch)

    prep = prepare_params(params)           # ONE-TIME pad/cast (hoisted off hot path)

    out = mlp_resblock_relu(x, prep)        # auto tile_m (e.g. 64 -> grid=(2,))
    out = jax.block_until_ready(out)
    out_np = np.asarray(out)

    assert out_np.shape == (B, out_ch)

    # Tight check vs a mixed-precision (bf16-operand) JAX reference.
    ref_mixed = np.asarray(reference_forward_mixed(x, params))
    np.testing.assert_allclose(out_np, ref_mixed, rtol=2e-3, atol=2e-3)

    # Looser check vs the exact f32 PyTorch semantics (bf16 operands => ~1e-2 error).
    ref_f32 = np.asarray(reference_forward(x, params))
    np.testing.assert_allclose(out_np, ref_f32, rtol=5e-2, atol=5e-2)

    print("KERNEL_OK")
</pallas_src>

<mosaic_0001>
module attributes {stable_mosaic.version = 11 : i64} {
  func.func @mlp_resblock_kernel(%arg0: i32, %arg1: memref<64x16xf32, #tpu.memory_space<vmem>>, %arg2: memref<16x128xbf16, #tpu.memory_space<vmem>>, %arg3: memref<1x128xf32, #tpu.memory_space<vmem>>, %arg4: memref<3x128x128xbf16, #tpu.memory_space<vmem>>, %arg5: memref<3x1x128xf32, #tpu.memory_space<vmem>>, %arg6: memref<3x128x128xbf16, #tpu.memory_space<vmem>>, %arg7: memref<3x1x128xf32, #tpu.memory_space<vmem>>, %arg8: memref<128x128xbf16, #tpu.memory_space<vmem>>, %arg9: memref<1x128xf32, #tpu.memory_space<vmem>>, %arg10: memref<128x8xbf16, #tpu.memory_space<vmem>>, %arg11: memref<1x8xf32, #tpu.memory_space<vmem>>, %arg12: memref<64x8xf32, #tpu.memory_space<vmem>>) attributes {dimension_semantics = [#tpu.dimension_semantics<parallel>], iteration_bounds = array<i64: 2>, scalar_prefetch = 0 : i64, scratch_operands = 0 : i64, tpu.core_type = #tpu.core_type<tc>, window_params = [{transform_indices = @transform_0, window_bounds = array<i64: 64, 16>}, {pipeline_mode = #tpu.pipeline_mode<synchronous>, transform_indices = @transform_1, window_bounds = array<i64: 16, 128>}, {pipeline_mode = #tpu.pipeline_mode<synchronous>, transform_indices = @transform_2, window_bounds = array<i64: 1, 128>}, {pipeline_mode = #tpu.pipeline_mode<synchronous>, transform_indices = @transform_3, window_bounds = array<i64: 3, 128, 128>}, {pipeline_mode = #tpu.pipeline_mode<synchronous>, transform_indices = @transform_4, window_bounds = array<i64: 3, 1, 128>}, {pipeline_mode = #tpu.pipeline_mode<synchronous>, transform_indices = @transform_5, window_bounds = array<i64: 3, 128, 128>}, {pipeline_mode = #tpu.pipeline_mode<synchronous>, transform_indices = @transform_6, window_bounds = array<i64: 3, 1, 128>}, {pipeline_mode = #tpu.pipeline_mode<synchronous>, transform_indices = @transform_7, window_bounds = array<i64: 128, 128>}, {pipeline_mode = #tpu.pipeline_mode<synchronous>, transform_indices = @transform_8, window_bounds = array<i64: 1, 128>}, {pipeline_mode = #tpu.pipeline_mode<synchronous>, transform_indices = @transform_9, window_bounds = array<i64: 128, 8>}, {pipeline_mode = #tpu.pipeline_mode<synchronous>, transform_indices = @transform_10, window_bounds = array<i64: 1, 8>}, {transform_indices = @transform_11, window_bounds = array<i64: 64, 8>}]} {
    %c0 = arith.constant 0 : index
    %c0_0 = arith.constant 0 : index
    %0 = vector.load %arg1[%c0, %c0_0] : memref<64x16xf32, #tpu.memory_space<vmem>>, vector<64x16xf32>
    %1 = arith.truncf %0 : vector<64x16xf32> to vector<64x16xbf16>
    %c0_1 = arith.constant 0 : index
    %c0_2 = arith.constant 0 : index
    %2 = vector.load %arg2[%c0_1, %c0_2] : memref<16x128xbf16, #tpu.memory_space<vmem>>, vector<16x128xbf16>
    %cst = arith.constant dense<0.000000e+00> : vector<64x128xf32>
    %3 = tpu.matmul %1, %2, %cst {dimension_numbers = #tpu.dot_dimension_numbers<[1], [0], [0], [1], [0, 0, 1, 1], [], []>} : vector<64x16xbf16>, vector<16x128xbf16>, vector<64x128xf32> -> vector<64x128xf32>
    %c0_3 = arith.constant 0 : index
    %c0_4 = arith.constant 0 : index
    %4 = vector.load %arg3[%c0_3, %c0_4] : memref<1x128xf32, #tpu.memory_space<vmem>>, vector<1x128xf32>
    %5 = vector.broadcast %4 : vector<1x128xf32> to vector<64x128xf32>
    %6 = arith.addf %3, %5 : vector<64x128xf32>
    %cst_5 = arith.constant 1.000000e-01 : f32
    %7 = vector.broadcast %cst_5 : f32 to vector<64x128xf32>
    %8 = arith.mulf %7, %6 : vector<64x128xf32>
    %9 = arith.maximumf %6, %8 : vector<64x128xf32>
    %10 = arith.truncf %9 : vector<64x128xf32> to vector<64x128xbf16>
    %c0_6 = arith.constant 0 : index
    %c0_7 = arith.constant 0 : index
    %c0_8 = arith.constant 0 : index
    %11 = vector.load %arg4[%c0_6, %c0_7, %c0_8] : memref<3x128x128xbf16, #tpu.memory_space<vmem>>, vector<1x128x128xbf16>
    %12 = vector.shape_cast %11 : vector<1x128x128xbf16> to vector<128x128xbf16>
    %cst_9 = arith.constant dense<0.000000e+00> : vector<64x128xf32>
    %13 = tpu.matmul %10, %12, %cst_9 {dimension_numbers = #tpu.dot_dimension_numbers<[1], [0], [0], [1], [0, 0, 1, 1], [], []>} : vector<64x128xbf16>, vector<128x128xbf16>, vector<64x128xf32> -> vector<64x128xf32>
    %c0_10 = arith.constant 0 : index
    %c0_11 = arith.constant 0 : index
    %c0_12 = arith.constant 0 : index
    %14 = vector.load %arg5[%c0_10, %c0_11, %c0_12] : memref<3x1x128xf32, #tpu.memory_space<vmem>>, vector<1x1x128xf32>
    %15 = vector.shape_cast %14 : vector<1x1x128xf32> to vector<1x128xf32>
    %16 = vector.broadcast %15 : vector<1x128xf32> to vector<64x128xf32>
    %17 = arith.addf %13, %16 : vector<64x128xf32>
    %cst_13 = arith.constant 1.000000e-01 : f32
    %18 = vector.broadcast %cst_13 : f32 to vector<64x128xf32>
    %19 = arith.mulf %18, %17 : vector<64x128xf32>
    %20 = arith.maximumf %17, %19 : vector<64x128xf32>
    %21 = arith.truncf %20 : vector<64x128xf32> to vector<64x128xbf16>
    %c0_14 = arith.constant 0 : index
    %c0_15 = arith.constant 0 : index
    %c0_16 = arith.constant 0 : index
    %22 = vector.load %arg6[%c0_14, %c0_15, %c0_16] : memref<3x128x128xbf16, #tpu.memory_space<vmem>>, vector<1x128x128xbf16>
    %23 = vector.shape_cast %22 : vector<1x128x128xbf16> to vector<128x128xbf16>
    %cst_17 = arith.constant dense<0.000000e+00> : vector<64x128xf32>
    %24 = tpu.matmul %21, %23, %cst_17 {dimension_numbers = #tpu.dot_dimension_numbers<[1], [0], [0], [1], [0, 0, 1, 1], [], []>} : vector<64x128xbf16>, vector<128x128xbf16>, vector<64x128xf32> -> vector<64x128xf32>
    %c0_18 = arith.constant 0 : index
    %c0_19 = arith.constant 0 : index
    %c0_20 = arith.constant 0 : index
    %25 = vector.load %arg7[%c0_18, %c0_19, %c0_20] : memref<3x1x128xf32, #tpu.memory_space<vmem>>, vector<1x1x128xf32>
    %26 = vector.shape_cast %25 : vector<1x1x128xf32> to vector<1x128xf32>
    %27 = vector.broadcast %26 : vector<1x128xf32> to vector<64x128xf32>
    %28 = arith.addf %24, %27 : vector<64x128xf32>
    %29 = arith.addf %28, %9 : vector<64x128xf32>
    %cst_21 = arith.constant 1.000000e-01 : f32
    %30 = vector.broadcast %cst_21 : f32 to vector<64x128xf32>
    %31 = arith.mulf %30, %29 : vector<64x128xf32>
    %32 = arith.maximumf %29, %31 : vector<64x128xf32>
    %33 = arith.truncf %32 : vector<64x128xf32> to vector<64x128xbf16>
    %c1 = arith.constant 1 : index
    %c0_22 = arith.constant 0 : index
    %c0_23 = arith.constant 0 : index
    %34 = vector.load %arg4[%c1, %c0_22, %c0_23] : memref<3x128x128xbf16, #tpu.memory_space<vmem>>, vector<1x128x128xbf16>
    %35 = vector.shape_cast %34 : vector<1x128x128xbf16> to vector<128x128xbf16>
    %cst_24 = arith.constant dense<0.000000e+00> : vector<64x128xf32>
    %36 = tpu.matmul %33, %35, %cst_24 {dimension_numbers = #tpu.dot_dimension_numbers<[1], [0], [0], [1], [0, 0, 1, 1], [], []>} : vector<64x128xbf16>, vector<128x128xbf16>, vector<64x128xf32> -> vector<64x128xf32>
    %c1_25 = arith.constant 1 : index
    %c0_26 = arith.constant 0 : index
    %c0_27 = arith.constant 0 : index
    %37 = vector.load %arg5[%c1_25, %c0_26, %c0_27] : memref<3x1x128xf32, #tpu.memory_space<vmem>>, vector<1x1x128xf32>
    %38 = vector.shape_cast %37 : vector<1x1x128xf32> to vector<1x128xf32>
    %39 = vector.broadcast %38 : vector<1x128xf32> to vector<64x128xf32>
    %40 = arith.addf %36, %39 : vector<64x128xf32>
    %cst_28 = arith.constant 1.000000e-01 : f32
    %41 = vector.broadcast %cst_28 : f32 to vector<64x128xf32>
    %42 = arith.mulf %41, %40 : vector<64x128xf32>
    %43 = arith.maximumf %40, %42 : vector<64x128xf32>
    %44 = arith.truncf %43 : vector<64x128xf32> to vector<64x128xbf16>
    %c1_29 = arith.constant 1 : index
    %c0_30 = arith.constant 0 : index
    %c0_31 = arith.constant 0 : index
    %45 = vector.load %arg6[%c1_29, %c0_30, %c0_31] : memref<3x128x128xbf16, #tpu.memory_space<vmem>>, vector<1x128x128xbf16>
    %46 = vector.shape_cast %45 : vector<1x128x128xbf16> to vector<128x128xbf16>
    %cst_32 = arith.constant dense<0.000000e+00> : vector<64x128xf32>
    %47 = tpu.matmul %44, %46, %cst_32 {dimension_numbers = #tpu.dot_dimension_numbers<[1], [0], [0], [1], [0, 0, 1, 1], [], []>} : vector<64x128xbf16>, vector<128x128xbf16>, vector<64x128xf32> -> vector<64x128xf32>
    %c1_33 = arith.constant 1 : index
    %c0_34 = arith.constant 0 : index
    %c0_35 = arith.constant 0 : index
    %48 = vector.load %arg7[%c1_33, %c0_34, %c0_35] : memref<3x1x128xf32, #tpu.memory_space<vmem>>, vector<1x1x128xf32>
    %49 = vector.shape_cast %48 : vector<1x1x128xf32> to vector<1x128xf32>
    %50 = vector.broadcast %49 : vector<1x128xf32> to vector<64x128xf32>
    %51 = arith.addf %47, %50 : vector<64x128xf32>
    %52 = arith.addf %51, %32 : vector<64x128xf32>
    %cst_36 = arith.constant 1.000000e-01 : f32
    %53 = vector.broadcast %cst_36 : f32 to vector<64x128xf32>
    %54 = arith.mulf %53, %52 : vector<64x128xf32>
    %55 = arith.maximumf %52, %54 : vector<64x128xf32>
    %56 = arith.truncf %55 : vector<64x128xf32> to vector<64x128xbf16>
    %c2 = arith.constant 2 : index
    %c0_37 = arith.constant 0 : index
    %c0_38 = arith.constant 0 : index
    %57 = vector.load %arg4[%c2, %c0_37, %c0_38] : memref<3x128x128xbf16, #tpu.memory_space<vmem>>, vector<1x128x128xbf16>
    %58 = vector.shape_cast %57 : vector<1x128x128xbf16> to vector<128x128xbf16>
    %cst_39 = arith.constant dense<0.000000e+00> : vector<64x128xf32>
    %59 = tpu.matmul %56, %58, %cst_39 {dimension_numbers = #tpu.dot_dimension_numbers<[1], [0], [0], [1], [0, 0, 1, 1], [], []>} : vector<64x128xbf16>, vector<128x128xbf16>, vector<64x128xf32> -> vector<64x128xf32>
    %c2_40 = arith.constant 2 : index
    %c0_41 = arith.constant 0 : index
    %c0_42 = arith.constant 0 : index
    %60 = vector.load %arg5[%c2_40, %c0_41, %c0_42] : memref<3x1x128xf32, #tpu.memory_space<vmem>>, vector<1x1x128xf32>
    %61 = vector.shape_cast %60 : vector<1x1x128xf32> to vector<1x128xf32>
    %62 = vector.broadcast %61 : vector<1x128xf32> to vector<64x128xf32>
    %63 = arith.addf %59, %62 : vector<64x128xf32>
    %cst_43 = arith.constant 1.000000e-01 : f32
    %64 = vector.broadcast %cst_43 : f32 to vector<64x128xf32>
    %65 = arith.mulf %64, %63 : vector<64x128xf32>
    %66 = arith.maximumf %63, %65 : vector<64x128xf32>
    %67 = arith.truncf %66 : vector<64x128xf32> to vector<64x128xbf16>
    %c2_44 = arith.constant 2 : index
    %c0_45 = arith.constant 0 : index
    %c0_46 = arith.constant 0 : index
    %68 = vector.load %arg6[%c2_44, %c0_45, %c0_46] : memref<3x128x128xbf16, #tpu.memory_space<vmem>>, vector<1x128x128xbf16>
    %69 = vector.shape_cast %68 : vector<1x128x128xbf16> to vector<128x128xbf16>
    %cst_47 = arith.constant dense<0.000000e+00> : vector<64x128xf32>
    %70 = tpu.matmul %67, %69, %cst_47 {dimension_numbers = #tpu.dot_dimension_numbers<[1], [0], [0], [1], [0, 0, 1, 1], [], []>} : vector<64x128xbf16>, vector<128x128xbf16>, vector<64x128xf32> -> vector<64x128xf32>
    %c2_48 = arith.constant 2 : index
    %c0_49 = arith.constant 0 : index
    %c0_50 = arith.constant 0 : index
    %71 = vector.load %arg7[%c2_48, %c0_49, %c0_50] : memref<3x1x128xf32, #tpu.memory_space<vmem>>, vector<1x1x128xf32>
    %72 = vector.shape_cast %71 : vector<1x1x128xf32> to vector<1x128xf32>
    %73 = vector.broadcast %72 : vector<1x128xf32> to vector<64x128xf32>
    %74 = arith.addf %70, %73 : vector<64x128xf32>
    %75 = arith.addf %74, %55 : vector<64x128xf32>
    %cst_51 = arith.constant 1.000000e-01 : f32
    %76 = vector.broadcast %cst_51 : f32 to vector<64x128xf32>
    %77 = arith.mulf %76, %75 : vector<64x128xf32>
    %78 = arith.maximumf %75, %77 : vector<64x128xf32>
    %79 = arith.truncf %78 : vector<64x128xf32> to vector<64x128xbf16>
    %c0_52 = arith.constant 0 : index
    %c0_53 = arith.constant 0 : index
    %80 = vector.load %arg8[%c0_52, %c0_53] : memref<128x128xbf16, #tpu.memory_space<vmem>>, vector<128x128xbf16>
    %cst_54 = arith.constant dense<0.000000e+00> : vector<64x128xf32>
    %81 = tpu.matmul %79, %80, %cst_54 {dimension_numbers = #tpu.dot_dimension_numbers<[1], [0], [0], [1], [0, 0, 1, 1], [], []>} : vector<64x128xbf16>, vector<128x128xbf16>, vector<64x128xf32> -> vector<64x128xf32>
    %c0_55 = arith.constant 0 : index
    %c0_56 = arith.constant 0 : index
    %82 = vector.load %arg9[%c0_55, %c0_56] : memref<1x128xf32, #tpu.memory_space<vmem>>, vector<1x128xf32>
    %83 = vector.broadcast %82 : vector<1x128xf32> to vector<64x128xf32>
    %84 = arith.addf %81, %83 : vector<64x128xf32>
    %cst_57 = arith.constant 1.000000e-01 : f32
    %85 = vector.broadcast %cst_57 : f32 to vector<64x128xf32>
    %86 = arith.mulf %85, %84 : vector<64x128xf32>
    %87 = arith.maximumf %84, %86 : vector<64x128xf32>
    %88 = arith.truncf %87 : vector<64x128xf32> to vector<64x128xbf16>
    %c0_58 = arith.constant 0 : index
    %c0_59 = arith.constant 0 : index
    %89 = vector.load %arg10[%c0_58, %c0_59] : memref<128x8xbf16, #tpu.memory_space<vmem>>, vector<128x8xbf16>
    %cst_60 = arith.constant dense<0.000000e+00> : vector<64x8xf32>
    %90 = tpu.matmul %88, %89, %cst_60 {dimension_numbers = #tpu.dot_dimension_numbers<[1], [0], [0], [1], [0, 0, 1, 1], [], []>} : vector<64x128xbf16>, vector<128x8xbf16>, vector<64x8xf32> -> vector<64x8xf32>
    %c0_61 = arith.constant 0 : index
    %c0_62 = arith.constant 0 : index
    %91 = vector.load %arg11[%c0_61, %c0_62] : memref<1x8xf32, #tpu.memory_space<vmem>>, vector<1x8xf32>
    %92 = vector.broadcast %91 : vector<1x8xf32> to vector<64x8xf32>
    %93 = arith.addf %90, %92 : vector<64x8xf32>
    %cst_63 = arith.constant 0.000000e+00 : f32
    %94 = vector.broadcast %cst_63 : f32 to vector<64x8xf32>
    %95 = arith.maximumf %93, %94 : vector<64x8xf32>
    %c0_64 = arith.constant 0 : index
    %c0_65 = arith.constant 0 : index
    %96 = vector.load %arg12[%c0_64, %c0_65] : memref<64x8xf32, #tpu.memory_space<vmem>>, vector<64x8xf32>
    tpu.vector_store %arg12[%c0_64, %c0_65], %95 {strides = array<i32>} : memref<64x8xf32, #tpu.memory_space<vmem>>, vector<64x8xf32>,
    return
  }
  func.func @transform_0(%arg0: i32) -> (i32, i32) {
    %c0_i32 = arith.constant 0 : i32
    %c0_i32_0 = arith.constant 0 : i32
    return %arg0, %c0_i32 : i32, i32
  }
  func.func @transform_1(%arg0: i32) -> (i32, i32) {
    %c0_i32 = arith.constant 0 : i32
    %c0_i32_0 = arith.constant 0 : i32
    %c0_i32_1 = arith.constant 0 : i32
    return %c0_i32, %c0_i32_0 : i32, i32
  }
  func.func @transform_2(%arg0: i32) -> (i32, i32) {
    %c0_i32 = arith.constant 0 : i32
    %c0_i32_0 = arith.constant 0 : i32
    %c0_i32_1 = arith.constant 0 : i32
    return %c0_i32, %c0_i32_0 : i32, i32
  }
  func.func @transform_3(%arg0: i32) -> (i32, i32, i32) {
    %c0_i32 = arith.constant 0 : i32
    %c0_i32_0 = arith.constant 0 : i32
    %c0_i32_1 = arith.constant 0 : i32
    %c0_i32_2 = arith.constant 0 : i32
    return %c0_i32, %c0_i32_0, %c0_i32_1 : i32, i32, i32
  }
  func.func @transform_4(%arg0: i32) -> (i32, i32, i32) {
    %c0_i32 = arith.constant 0 : i32
    %c0_i32_0 = arith.constant 0 : i32
    %c0_i32_1 = arith.constant 0 : i32
    %c0_i32_2 = arith.constant 0 : i32
    return %c0_i32, %c0_i32_0, %c0_i32_1 : i32, i32, i32
  }
  func.func @transform_5(%arg0: i32) -> (i32, i32, i32) {
    %c0_i32 = arith.constant 0 : i32
    %c0_i32_0 = arith.constant 0 : i32
    %c0_i32_1 = arith.constant 0 : i32
    %c0_i32_2 = arith.constant 0 : i32
    return %c0_i32, %c0_i32_0, %c0_i32_1 : i32, i32, i32
  }
  func.func @transform_6(%arg0: i32) -> (i32, i32, i32) {
    %c0_i32 = arith.constant 0 : i32
    %c0_i32_0 = arith.constant 0 : i32
    %c0_i32_1 = arith.constant 0 : i32
    %c0_i32_2 = arith.constant 0 : i32
    return %c0_i32, %c0_i32_0, %c0_i32_1 : i32, i32, i32
  }
  func.func @transform_7(%arg0: i32) -> (i32, i32) {
    %c0_i32 = arith.constant 0 : i32
    %c0_i32_0 = arith.constant 0 : i32
    %c0_i32_1 = arith.constant 0 : i32
    return %c0_i32, %c0_i32_0 : i32, i32
  }
  func.func @transform_8(%arg0: i32) -> (i32, i32) {
    %c0_i32 = arith.constant 0 : i32
    %c0_i32_0 = arith.constant 0 : i32
    %c0_i32_1 = arith.constant 0 : i32
    return %c0_i32, %c0_i32_0 : i32, i32
  }
  func.func @transform_9(%arg0: i32) -> (i32, i32) {
    %c0_i32 = arith.constant 0 : i32
    %c0_i32_0 = arith.constant 0 : i32
    %c0_i32_1 = arith.constant 0 : i32
    return %c0_i32, %c0_i32_0 : i32, i32
  }
  func.func @transform_10(%arg0: i32) -> (i32, i32) {
    %c0_i32 = arith.constant 0 : i32
    %c0_i32_0 = arith.constant 0 : i32
    %c0_i32_1 = arith.constant 0 : i32
    return %c0_i32, %c0_i32_0 : i32, i32
  }
  func.func @transform_11(%arg0: i32) -> (i32, i32) {
    %c0_i32 = arith.constant 0 : i32
    %c0_i32_0 = arith.constant 0 : i32
    return %arg0, %c0_i32 : i32, i32
  }
}

</mosaic_0001>

<llo_original>
// kernel: tpu_custom_call.1
$region0: #{tpu_custom_call.1}
  #allocation0 [shape = 'u32[]', space=smem, size = 0x4, offset = 0x4, fixed_abs, tag = 'smem constant byte address 0x4 - core index']
  #allocation1 [shape = 'u32[144,128]{1,0:T(1,128)}', space=vmem, size = 0x12000, scoped, tag = 'internal scratch']
  %s0 = inlined_call_operand.vmem [shape: f32[128,16], index: 0, kind: input, shape index: {}]
  %s1 = inlined_call_operand.vmem [shape: bf16[16,128], index: 1, kind: input, shape index: {}]
  %s2 = inlined_call_operand.vmem [shape: f32[1,128], index: 2, kind: input, shape index: {}]
  %s3 = inlined_call_operand.vmem [shape: bf16[3,128,128], index: 3, kind: input, shape index: {}]
  %s4 = inlined_call_operand.vmem [shape: f32[3,1,128], index: 4, kind: input, shape index: {}]
  %s5 = inlined_call_operand.hbm [shape: bf16[3,128,128], index: 5, kind: input, shape index: {}]
  %s6 = inlined_call_operand.vmem [shape: f32[3,1,128], index: 6, kind: input, shape index: {}]
  %s7 = inlined_call_operand.hbm [shape: bf16[128,128], index: 7, kind: input, shape index: {}]
  %s8 = inlined_call_operand.vmem [shape: f32[1,128], index: 8, kind: input, shape index: {}]
  %s9 = inlined_call_operand.vmem [shape: bf16[128,8], index: 9, kind: input, shape index: {}]
  %s10 = inlined_call_operand.vmem [shape: f32[1,8], index: 10, kind: input, shape index: {}]
  %s11 = inlined_call_operand.vmem [shape: f32[128,8], index: 11, kind: output, shape index: {}]
  %s12 = sld [smem:[#allocation0]]
  $region85: #{tpu_custom_call.1} parent=0
    _
  %s14 = ssub.s32 1, %s12
  %s15 = scalar_select 0, %s14, %s12
  $region1: #{tpu_custom_call.1} parent=0
    #allocation2 [shape = 'u8[98304]{0}', space=vmem, size = 0x18000, scoped, tag = 'input window, operand 5, single buffered']
    #allocation3 [shape = 's32[2]{0}', space=sflag, size = 0x8, scoped, tag = 'scoped memory for tpu_custom_call.1']
    #allocation4 [shape = 'u8[32768]{0}', space=vmem, size = 0x8000, scoped, tag = 'input window, operand 7, single buffered']
    #allocation5 [shape = 's32[1]{0}', space=sflag, size = 0x4, scoped, tag = 'scoped memory for tpu_custom_call.1']
    %16 = vsyncpa [#allocation3], 0
    %17 = vsyncpa [#allocation5], 0
    loop: start=0, step=1, limit=4
    $region2: #{tpu_custom_call.1} parent=1 // loop_pre_header
      _
    $region3: #{tpu_custom_call.1} parent=1 // loop_header
      %s19 = sphi 0, %s23
      %p20 = scmp.ge.s32.totalorder %s19, 4
      %s29 = sphi 0, %s31
      %s32 = sphi 0, %s29
      %s33 = sphi 0, %s32
      %s49 = sphi 0, %s33
      %s53 = sphi 0, %s53
      %s55 = sphi 0, %s53
      %s56 = sphi 0, %s55
      %s70 = sphi 0, %s56
      %s74 = sphi 0, %s74
      %s76 = sphi 0, %s74
      %s77 = sphi 0, %s76
      %s91 = sphi 0, %s77
      %s95 = sphi 0, %s95
      %s97 = sphi 0, %s95
      %s98 = sphi 0, %s97
      %s112 = sphi 0, %s98
      %s116 = sphi 0, %s116
      %s118 = sphi 0, %s116
      %s119 = sphi 0, %s118
      %s133 = sphi 0, %s119
      %s137 = sphi 0, %s137
      %s139 = sphi 0, %s137
      %s140 = sphi 0, %s139
      %s154 = sphi 0, %s140
      %s158 = sphi 0, %s158
      %s160 = sphi 0, %s158
      %s161 = sphi 0, %s160
      %s175 = sphi 0, %s161
      %s179 = sphi 0, %s179
      %s181 = sphi 0, %s179
      %s182 = sphi 0, %s181
      %s196 = sphi 0, %s182
      %s200 = sphi 0, %s200
      %s202 = sphi 0, %s200
      %s203 = sphi 0, %s202
      %s217 = sphi 0, %s203
      %s221 = sphi 0, %s221
      %s223 = sphi 0, %s221
      %s224 = sphi 0, %s223
      %s238 = sphi 0, %s224
      %s242 = sphi 0, %s242
      %s244 = sphi 0, %s242
      %s245 = sphi 0, %s244
      %s259 = sphi 0, %s245
      %s265 = sphi 0, %s267
      %s268 = sphi 0, %s265
      %s269 = sphi 0, %s268
      %s285 = sphi 0, %s269
    $region4: #{tpu_custom_call.1} parent=1 // loop_header_branch
      %22 = sbr.rel (%p20) target = $region8
    $region5: #{tpu_custom_call.1} parent=1 // loop_body
      %s24 = ssub.s32 %s19, 1
      %s25 = ssub.s32 %s19, 2
      %s26 = sadd.s32 %s19, 1
      %s27 = ssub.s32 %s19, %s26
      %p28 = scmp.eq.s32.totalorder %s27, 0
      %s30 = sadd.s32 %s29, 1
      %s31 = scalar_select %p28, %s29, %s30
      %p34 = pneg %p28
      %p35 = scmp.eq.s32.totalorder %s19, 1
      %p36 = por %p34, %p35
      %p37 = scmp.ne.s32.totalorder %s29, %s32
      %p38 = scmp.eq.s32.totalorder %s19, 0
      %p39 = por %p37, %p38
      %p40 = scmp.ne.s32.totalorder %s29, %s32
      %p41 = scmp.eq.s32.totalorder %s24, 1
      %p42 = por %p40, %p41
      %p43 = scmp.ne.s32.totalorder %s32, %s33
      %p44 = scmp.eq.s32.totalorder %s24, 0
      %p45 = por %p43, %p44
      %p46 = scmp.ne.s32.totalorder %s32, %s33
      %p47 = scmp.eq.s32.totalorder %s25, 1
      %p48 = por %p46, %p47
      %p50 = scmp.ne.s32.totalorder %s33, %s49
      %p51 = scmp.eq.s32.totalorder %s25, 0
      %p52 = por %p50, %p51
      %s54 = sadd.s32 %s53, 1
      %p57 = scmp.eq.s32.totalorder %s19, 1
      %p58 = scmp.ne.s32.totalorder %s53, %s55
      %p59 = scmp.eq.s32.totalorder %s19, 0
      %p60 = por %p58, %p59
      %p61 = scmp.ne.s32.totalorder %s53, %s55
      %p62 = scmp.eq.s32.totalorder %s24, 1
      %p63 = por %p61, %p62
      %p64 = scmp.ne.s32.totalorder %s55, %s56
      %p65 = scmp.eq.s32.totalorder %s24, 0
      %p66 = por %p64, %p65
      %p67 = scmp.ne.s32.totalorder %s55, %s56
      %p68 = scmp.eq.s32.totalorder %s25, 1
      %p69 = por %p67, %p68
      %p71 = scmp.ne.s32.totalorder %s56, %s70
      %p72 = scmp.eq.s32.totalorder %s25, 0
      %p73 = por %p71, %p72
      %s75 = sadd.s32 %s74, 1
      %p78 = scmp.eq.s32.totalorder %s19, 1
      %p79 = scmp.ne.s32.totalorder %s74, %s76
      %p80 = scmp.eq.s32.totalorder %s19, 0
      %p81 = por %p79, %p80
      %p82 = scmp.ne.s32.totalorder %s74, %s76
      %p83 = scmp.eq.s32.totalorder %s24, 1
      %p84 = por %p82, %p83
      %p85 = scmp.ne.s32.totalorder %s76, %s77
      %p86 = scmp.eq.s32.totalorder %s24, 0
      %p87 = por %p85, %p86
      %p88 = scmp.ne.s32.totalorder %s76, %s77
      %p89 = scmp.eq.s32.totalorder %s25, 1
      %p90 = por %p88, %p89
      %p92 = scmp.ne.s32.totalorder %s77, %s91
      %p93 = scmp.eq.s32.totalorder %s25, 0
      %p94 = por %p92, %p93
      %s96 = sadd.s32 %s95, 1
      %p99 = scmp.eq.s32.totalorder %s19, 1
      %p100 = scmp.ne.s32.totalorder %s95, %s97
      %p101 = scmp.eq.s32.totalorder %s19, 0
      %p102 = por %p100, %p101
      %p103 = scmp.ne.s32.totalorder %s95, %s97
      %p104 = scmp.eq.s32.totalorder %s24, 1
      %p105 = por %p103, %p104
      %p106 = scmp.ne.s32.totalorder %s97, %s98
      %p107 = scmp.eq.s32.totalorder %s24, 0
      %p108 = por %p106, %p107
      %p109 = scmp.ne.s32.totalorder %s97, %s98
      %p110 = scmp.eq.s32.totalorder %s25, 1
      %p111 = por %p109, %p110
      %p113 = scmp.ne.s32.totalorder %s98, %s112
      %p114 = scmp.eq.s32.totalorder %s25, 0
      %p115 = por %p113, %p114
      %s117 = sadd.s32 %s116, 1
      %p120 = scmp.eq.s32.totalorder %s19, 1
      %p121 = scmp.ne.s32.totalorder %s116, %s118
      %p122 = scmp.eq.s32.totalorder %s19, 0
      %p123 = por %p121, %p122
      %p124 = scmp.ne.s32.totalorder %s116, %s118
      %p125 = scmp.eq.s32.totalorder %s24, 1
      %p126 = por %p124, %p125
      %p127 = scmp.ne.s32.totalorder %s118, %s119
      %p128 = scmp.eq.s32.totalorder %s24, 0
      %p129 = por %p127, %p128
      %p130 = scmp.ne.s32.totalorder %s118, %s119
      %p131 = scmp.eq.s32.totalorder %s25, 1
      %p132 = por %p130, %p131
      %p134 = scmp.ne.s32.totalorder %s119, %s133
      %p135 = scmp.eq.s32.totalorder %s25, 0
      %p136 = por %p134, %p135
      %s138 = sadd.s32 %s137, 1
      %p141 = scmp.eq.s32.totalorder %s19, 1
      %p142 = scmp.ne.s32.totalorder %s137, %s139
      %p143 = scmp.eq.s32.totalorder %s19, 0
      %p144 = por %p142, %p143
      %p145 = scmp.ne.s32.totalorder %s137, %s139
      %p146 = scmp.eq.s32.totalorder %s24, 1
      %p147 = por %p145, %p146
      %p148 = scmp.ne.s32.totalorder %s139, %s140
      %p149 = scmp.eq.s32.totalorder %s24, 0
      %p150 = por %p148, %p149
      %p151 = scmp.ne.s32.totalorder %s139, %s140
      %p152 = scmp.eq.s32.totalorder %s25, 1
      %p153 = por %p151, %p152
      %p155 = scmp.ne.s32.totalorder %s140, %s154
      %p156 = scmp.eq.s32.totalorder %s25, 0
      %p157 = por %p155, %p156
      %s159 = sadd.s32 %s158, 1
      %p162 = scmp.eq.s32.totalorder %s19, 1
      %p163 = scmp.ne.s32.totalorder %s158, %s160
      %p164 = scmp.eq.s32.totalorder %s19, 0
      %p165 = por %p163, %p164
      %p166 = scmp.ne.s32.totalorder %s158, %s160
      %p167 = scmp.eq.s32.totalorder %s24, 1
      %p168 = por %p166, %p167
      %p169 = scmp.ne.s32.totalorder %s160, %s161
      %p170 = scmp.eq.s32.totalorder %s24, 0
      %p171 = por %p169, %p170
      %p172 = scmp.ne.s32.totalorder %s160, %s161
      %p173 = scmp.eq.s32.totalorder %s25, 1
      %p174 = por %p172, %p173
      %p176 = scmp.ne.s32.totalorder %s161, %s175
      %p177 = scmp.eq.s32.totalorder %s25, 0
      %p178 = por %p176, %p177
      %s180 = sadd.s32 %s179, 1
      %p183 = scmp.eq.s32.totalorder %s19, 1
      %p184 = scmp.ne.s32.totalorder %s179, %s181
      %p185 = scmp.eq.s32.totalorder %s19, 0
      %p186 = por %p184, %p185
      %p187 = scmp.ne.s32.totalorder %s179, %s181
      %p188 = scmp.eq.s32.totalorder %s24, 1
      %p189 = por %p187, %p188
      %p190 = scmp.ne.s32.totalorder %s181, %s182
      %p191 = scmp.eq.s32.totalorder %s24, 0
      %p192 = por %p190, %p191
      %p193 = scmp.ne.s32.totalorder %s181, %s182
      %p194 = scmp.eq.s32.totalorder %s25, 1
      %p195 = por %p193, %p194
      %p197 = scmp.ne.s32.totalorder %s182, %s196
      %p198 = scmp.eq.s32.totalorder %s25, 0
      %p199 = por %p197, %p198
      %s201 = sadd.s32 %s200, 1
      %p204 = scmp.eq.s32.totalorder %s19, 1
      %p205 = scmp.ne.s32.totalorder %s200, %s202
      %p206 = scmp.eq.s32.totalorder %s19, 0
      %p207 = por %p205, %p206
      %p208 = scmp.ne.s32.totalorder %s200, %s202
      %p209 = scmp.eq.s32.totalorder %s24, 1
      %p210 = por %p208, %p209
      %p211 = scmp.ne.s32.totalorder %s202, %s203
      %p212 = scmp.eq.s32.totalorder %s24, 0
      %p213 = por %p211, %p212
      %p214 = scmp.ne.s32.totalorder %s202, %s203
      %p215 = scmp.eq.s32.totalorder %s25, 1
      %p216 = por %p214, %p215
      %p218 = scmp.ne.s32.totalorder %s203, %s217
      %p219 = scmp.eq.s32.totalorder %s25, 0
      %p220 = por %p218, %p219
      %s222 = sadd.s32 %s221, 1
      %p225 = scmp.eq.s32.totalorder %s19, 1
      %p226 = scmp.ne.s32.totalorder %s221, %s223
      %p227 = scmp.eq.s32.totalorder %s19, 0
      %p228 = por %p226, %p227
      %p229 = scmp.ne.s32.totalorder %s221, %s223
      %p230 = scmp.eq.s32.totalorder %s24, 1
      %p231 = por %p229, %p230
      %p232 = scmp.ne.s32.totalorder %s223, %s224
      %p233 = scmp.eq.s32.totalorder %s24, 0
      %p234 = por %p232, %p233
      %p235 = scmp.ne.s32.totalorder %s223, %s224
      %p236 = scmp.eq.s32.totalorder %s25, 1
      %p237 = por %p235, %p236
      %p239 = scmp.ne.s32.totalorder %s224, %s238
      %p240 = scmp.eq.s32.totalorder %s25, 0
      %p241 = por %p239, %p240
      %s243 = sadd.s32 %s242, 1
      %p246 = scmp.eq.s32.totalorder %s19, 1
      %p247 = scmp.ne.s32.totalorder %s242, %s244
      %p248 = scmp.eq.s32.totalorder %s19, 0
      %p249 = por %p247, %p248
      %p250 = scmp.ne.s32.totalorder %s242, %s244
      %p251 = scmp.eq.s32.totalorder %s24, 1
      %p252 = por %p250, %p251
      %p253 = scmp.ne.s32.totalorder %s244, %s245
      %p254 = scmp.eq.s32.totalorder %s24, 0
      %p255 = por %p253, %p254
      %p256 = scmp.ne.s32.totalorder %s244, %s245
      %p257 = scmp.eq.s32.totalorder %s25, 1
      %p258 = por %p256, %p257
      %p260 = scmp.ne.s32.totalorder %s245, %s259
      %p261 = scmp.eq.s32.totalorder %s25, 0
      %p262 = por %p260, %p261
      %s263 = ssub.s32 %s19, %s26
      %p264 = scmp.eq.s32.totalorder %s263, 0
      %s266 = sadd.s32 %s265, 1
      %s267 = scalar_select %p264, %s265, %s266
      %p270 = pneg %p264
      %p271 = scmp.eq.s32.totalorder %s19, 1
      %p272 = por %p270, %p271
      %p273 = scmp.ne.s32.totalorder %s265, %s268
      %p274 = scmp.eq.s32.totalorder %s19, 0
      %p275 = por %p273, %p274
      %p276 = scmp.ne.s32.totalorder %s265, %s268
      %p277 = scmp.eq.s32.totalorder %s24, 1
      %p278 = por %p276, %p277
      %p279 = scmp.ne.s32.totalorder %s268, %s269
      %p280 = scmp.eq.s32.totalorder %s24, 0
      %p281 = por %p279, %p280
      %p282 = scmp.ne.s32.totalorder %s268, %s269
      %p283 = scmp.eq.s32.totalorder %s25, 1
      %p284 = por %p282, %p283
      %p286 = scmp.ne.s32.totalorder %s269, %s285
      %p287 = scmp.eq.s32.totalorder %s25, 0
      %p288 = por %p286, %p287
      %p289 = scmp.le.s32.totalorder 1, %s19
      %p290 = scmp.lt.s32.totalorder %s19, 3
      %p291 = pnand %p289, %p290
      %p292 = pneg %p291
      // Predicated region
      $region9: #{tpu_custom_call.1} parent=5 // pred_check
        _
      $region10: #{tpu_custom_call.1} parent=5 // pred_check_branch
        %294 = sbr.rel (%p291) target = $region12
      $region11: #{tpu_custom_call.1} parent=5 // pred_region
        %s295 = ssub.s32 %s19, 1
        // Predicated region
        $region13: #{tpu_custom_call.1} parent=11 // pred_check
          %p296 = pneg %p66
        $region14: #{tpu_custom_call.1} parent=11 // pred_check_branch
          %298 = sbr.rel (%p296) target = $region16
        $region15: #{tpu_custom_call.1} parent=11 // pred_region
          _
        $region16: #{tpu_custom_call.1} parent=11 // pred_fallthru
          _
        // Predicated region
        $region17: #{tpu_custom_call.1} parent=11 // pred_check
          %p299 = pneg %p87
        $region18: #{tpu_custom_call.1} parent=11 // pred_check_branch
          %301 = sbr.rel (%p299) target = $region20
        $region19: #{tpu_custom_call.1} parent=11 // pred_region
          _
        $region20: #{tpu_custom_call.1} parent=11 // pred_fallthru
          _
        // Predicated region
        $region21: #{tpu_custom_call.1} parent=11 // pred_check
          %p302 = pneg %p108
        $region22: #{tpu_custom_call.1} parent=11 // pred_check_branch
          %304 = sbr.rel (%p302) target = $region24
        $region23: #{tpu_custom_call.1} parent=11 // pred_region
          _
        $region24: #{tpu_custom_call.1} parent=11 // pred_fallthru
          _
        // Predicated region
        $region25: #{tpu_custom_call.1} parent=11 // pred_check
          %p305 = pneg %p129
        $region26: #{tpu_custom_call.1} parent=11 // pred_check_branch
          %307 = sbr.rel (%p305) target = $region28
        $region27: #{tpu_custom_call.1} parent=11 // pred_region
          _
        $region28: #{tpu_custom_call.1} parent=11 // pred_fallthru
          _
        // Predicated region
        $region29: #{tpu_custom_call.1} parent=11 // pred_check
          %p308 = pneg %p150
        $region30: #{tpu_custom_call.1} parent=11 // pred_check_branch
          %310 = sbr.rel (%p308) target = $region32
        $region31: #{tpu_custom_call.1} parent=11 // pred_region
          %s312 = ssub.s32 3072, 3072
          %313 = vsyncadd [#allocation3], %s312
          %s314 = sshll.u32 [#allocation2], 4
          %s315 = int_to_ptr.vmem [resolvable:$true] %s314
          %320 = dma.hbm_to_vmem [thread:$0]  %s5, 3072, %s315, [#allocation3], 64, 64, 4
        $region32: #{tpu_custom_call.1} parent=11 // pred_fallthru
          _
        // Predicated region
        $region33: #{tpu_custom_call.1} parent=11 // pred_check
          %p321 = pneg %p171
        $region34: #{tpu_custom_call.1} parent=11 // pred_check_branch
          %323 = sbr.rel (%p321) target = $region36
        $region35: #{tpu_custom_call.1} parent=11 // pred_region
          _
        $region36: #{tpu_custom_call.1} parent=11 // pred_fallthru
          _
        // Predicated region
        $region37: #{tpu_custom_call.1} parent=11 // pred_check
          %p324 = pneg %p192
        $region38: #{tpu_custom_call.1} parent=11 // pred_check_branch
          %326 = sbr.rel (%p324) target = $region40
        $region39: #{tpu_custom_call.1} parent=11 // pred_region
          %s328 = ssub.s32 1024, 1024
          %329 = vsyncadd [#allocation5], %s328
          %s330 = sshll.u32 [#allocation4], 4
          %s331 = int_to_ptr.vmem [resolvable:$true] %s330
          %336 = dma.hbm_to_vmem [thread:$0]  %s7, 1024, %s331, [#allocation5], 64, 64, 4
        $region40: #{tpu_custom_call.1} parent=11 // pred_fallthru
          _
        // Predicated region
        $region41: #{tpu_custom_call.1} parent=11 // pred_check
          %p337 = pneg %p213
        $region42: #{tpu_custom_call.1} parent=11 // pred_check_branch
          %339 = sbr.rel (%p337) target = $region44
        $region43: #{tpu_custom_call.1} parent=11 // pred_region
          _
        $region44: #{tpu_custom_call.1} parent=11 // pred_fallthru
          _
        // Predicated region
        $region45: #{tpu_custom_call.1} parent=11 // pred_check
          %p340 = pneg %p234
        $region46: #{tpu_custom_call.1} parent=11 // pred_check_branch
          %342 = sbr.rel (%p340) target = $region48
        $region47: #{tpu_custom_call.1} parent=11 // pred_region
          _
        $region48: #{tpu_custom_call.1} parent=11 // pred_fallthru
          _
        // Predicated region
        $region49: #{tpu_custom_call.1} parent=11 // pred_check
          %p343 = pneg %p255
        $region50: #{tpu_custom_call.1} parent=11 // pred_check_branch
          %345 = sbr.rel (%p343) target = $region52
        $region51: #{tpu_custom_call.1} parent=11 // pred_region
          _
        $region52: #{tpu_custom_call.1} parent=11 // pred_fallthru
          _
      $region12: #{tpu_custom_call.1} parent=5 // pred_fallthru
        _
      %p346 = scmp.lt.s32.totalorder %s19, 2
      // Predicated region
      $region53: #{tpu_custom_call.1} parent=5 // pred_check
        %p347 = pneg %p346
      $region54: #{tpu_custom_call.1} parent=5 // pred_check_branch
        %349 = sbr.rel (%p347) target = $region56
      $region55: #{tpu_custom_call.1} parent=5 // pred_region
        // Predicated region
        $region57: #{tpu_custom_call.1} parent=55 // pred_check
          %p350 = pneg %p39
        $region58: #{tpu_custom_call.1} parent=55 // pred_check_branch
          %352 = sbr.rel (%p350) target = $region60
        $region59: #{tpu_custom_call.1} parent=55 // pred_region
          %s353 = smul.u32 8, %s19
          %p354 = scmp.lt.s32.totalorder %s353, 15
          %s355 = scalar_select %p354, %s353, 15
          %s356 = smul.addr %s355, 8
          %s357 = scalar_lea.vmem %s0, %s356
          %s358 = smul.u32 8, %s19
        $region60: #{tpu_custom_call.1} parent=55 // pred_fallthru
          _
      $region56: #{tpu_custom_call.1} parent=5 // pred_fallthru
        _
      %p359 = scmp.le.s32.totalorder 1, %s19
      %p360 = scmp.lt.s32.totalorder %s19, 3
      %p361 = pnand %p359, %p360
      %p362 = pneg %p361
      // Predicated region
      $region61: #{tpu_custom_call.1} parent=5 // pred_check
        _
      $region62: #{tpu_custom_call.1} parent=5 // pred_check_branch
        %364 = sbr.rel (%p361) target = $region64
      $region63: #{tpu_custom_call.1} parent=5 // pred_region
        %s365 = ssub.s32 %s19, 1
        // Predicated region
        $region65: #{tpu_custom_call.1} parent=63 // pred_check
          %p366 = pneg %p150
        $region66: #{tpu_custom_call.1} parent=63 // pred_check_branch
          %368 = sbr.rel (%p366) target = $region68
        $region67: #{tpu_custom_call.1} parent=63 // pred_region
          %369 = dma.done [#allocation3], 3072
        $region68: #{tpu_custom_call.1} parent=63 // pred_fallthru
          _
        // Predicated region
        $region69: #{tpu_custom_call.1} parent=63 // pred_check
          %p370 = pneg %p192
        $region70: #{tpu_custom_call.1} parent=63 // pred_check_branch
          %372 = sbr.rel (%p370) target = $region72
        $region71: #{tpu_custom_call.1} parent=63 // pred_region
          %373 = dma.done [#allocation5], 1024
        $region72: #{tpu_custom_call.1} parent=63 // pred_fallthru
          _
        %s374 = smul.u32 8, %s24
        %p375 = scmp.lt.s32.totalorder %s374, 15
        %s376 = scalar_select %p375, %s374, 15
        %s377 = smul.addr %s376, 8
        %s378 = scalar_lea.vmem %s0, %s377
        %p379 = pneg %p45
        %p380 = pneg %p42
        %p381 = pneg %p66
        %p382 = pneg %p63
        %p383 = pneg %p87
        %p384 = pneg %p84
        %p385 = pneg %p108
        %p386 = pneg %p105
        %p387 = pneg %p129
        %p388 = pneg %p126
        %p389 = pneg %p150
        %p390 = pneg %p147
        %p391 = pneg %p171
        %p392 = pneg %p168
        %p393 = pneg %p192
        %p394 = pneg %p189
        %p395 = pneg %p213
        %p396 = pneg %p210
        %p397 = pneg %p234
        %p398 = pneg %p231
        %p399 = pneg %p255
        %p400 = pneg %p252
        %p401 = pneg %p281
        %p402 = pneg %p278
        %s403 = smul.u32 8, %s24
        %p404 = scmp.lt.s32.totalorder %s403, 15
        %s405 = scalar_select %p404, %s403, 15
        %s406 = smul.addr %s405, 8
        %s407 = scalar_lea.vmem %s11, %s406
        %s408 = smul.u32 8, %s24
        %p409 = scmp.lt.s32.totalorder %s408, 15
        %s410 = scalar_select %p409, %s408, 15
        %s411 = smul.addr %s410, 8
        %s412 = scalar_lea.vmem %s0, %s411
        %s413 = smul.u32 8, %s24
        %s414 = smul.u32 8, %s24
        %p415 = scmp.lt.s32.totalorder %s414, 15
        %s416 = scalar_select %p415, %s414, 15
        %s417 = smul.addr %s416, 8
        %s418 = scalar_lea.vmem %s11, %s417
        %s419 = smul.u32 8, %s24
        %v421 = vld [vmem:[%s412] sm:$0xff]
        %v422 = vld [vmem:[%s412 + $0x8] sm:$0xff]
        %v423 = vld [vmem:[%s412 + $0x10] sm:$0xff]
        %v424 = vld [vmem:[%s412 + $0x18] sm:$0xff]
        %v425 = vld [vmem:[%s412 + $0x20] sm:$0xff]
        %v426 = vld [vmem:[%s412 + $0x28] sm:$0xff]
        %v427 = vld [vmem:[%s412 + $0x30] sm:$0xff]
        %v428 = vld [vmem:[%s412 + $0x38] sm:$0xff]
        %v429 = vpack.c.bf16 %v422, %v421
        %v430 = vpack.c.bf16 %v424, %v423
        %v431 = vpack.c.bf16 %v426, %v425
        %v432 = vpack.c.bf16 %v428, %v427
        %v433 = vld [vmem:[%s1] sm:$0xf]
        %v434 = vld [vmem:[%s1 + $0x4] sm:$0xf]
        %v435 = vld [vmem:[%s2] sm:$0x1]
        %v437 = vlaneseq
        %v438 = vshrl.u32 %v437, 7
        %v439 = vsub.s32 0, %v438
        %v440 = vrot.slane %v435, %v439
        %v444 = vunpack.c.l.b16 %v433
        %v445 = vunpack.c.l.b16 %v434
        %v446 = vpack.c.b16 %v445, %v444
        %vm448 = vcmask 130048
        %v450 = vsel %vm448, %v429, 0
        %v453 = vsel %vm448, %v430, 0
        %v456 = vsel %vm448, %v431, 0
        %v459 = vsel %vm448, %v432, 0
        %461 = vmatprep.subr.bf16.mxu0 0
        %462 = vmatpush1.bf16.msra.mxu0 %v446
        %463 = vmatprep.subr.bf16.mxu0 0
        %464 = vmatpush1.bf16.msra.mxu0 0
        %465 = vmatprep.subr.bf16.mxu0 0
        %466 = vmatpush1.bf16.msra.mxu0 0
        %467 = vmatprep.subr.bf16.mxu0 0
        %468 = vmatpush1.bf16.msra.mxu0 0
        %469 = vmatprep.subr.bf16.mxu0 0
        %470 = vmatpush1.bf16.msra.mxu0 0
        %471 = vmatprep.subr.bf16.mxu0 0
        %472 = vmatpush1.bf16.msra.mxu0 0
        %473 = vmatprep.subr.bf16.mxu0 0
        %474 = vmatpush1.bf16.msra.mxu0 0
        %475 = vmatprep.subr.bf16.mxu0 0
        %476 = vmatpush1.bf16.msra.mxu0 0
        %477 = vmatprep.subr.bf16.mxu0 0
        %478 = vmatpush1.bf16.msra.mxu0 0
        %479 = vmatprep.subr.bf16.mxu0 0
        %480 = vmatpush1.bf16.msra.mxu0 0
        %481 = vmatprep.subr.bf16.mxu0 0
        %482 = vmatpush1.bf16.msra.mxu0 0
        %483 = vmatprep.subr.bf16.mxu0 0
        %484 = vmatpush1.bf16.msra.mxu0 0
        %485 = vmatprep.subr.bf16.mxu0 0
        %486 = vmatpush1.bf16.msra.mxu0 0
        %487 = vmatprep.subr.bf16.mxu0 0
        %488 = vmatpush1.bf16.msra.mxu0 0
        %489 = vmatprep.subr.bf16.mxu0 0
        %490 = vmatpush1.bf16.msra.mxu0 0
        %491 = vmatprep.subr.bf16.mxu0 0
        %492 = vmatpush1.bf16.msra.mxu0 0
        %493 = vmatprep.mubr.bf16.mxu0 0
        %494 = vmatmul.mubr.bf16.gmra.mrb[0].mxu0 %v450
        %v495 = vpop.f32.mrb[0].mxu0
        %v496 = vadd.f32 %v440, %v495
        %v497 = vpop.f32.mrb[0].mxu0
        %v498 = vpop.f32.mrb[0].mxu0
        %v499 = vadd.f32 %v440, %v498
        %v500 = vpop.f32.mrb[0].mxu0
        %501 = vmatprep.mubr.bf16.mxu0 0
        %502 = vmatmul.mubr.bf16.gmra.mrb[0].mxu0 %v453
        %v503 = vpop.f32.mrb[0].mxu0
        %v504 = vadd.f32 %v440, %v503
        %v505 = vpop.f32.mrb[0].mxu0
        %v506 = vpop.f32.mrb[0].mxu0
        %v507 = vadd.f32 %v440, %v506
        %v508 = vpop.f32.mrb[0].mxu0
        %509 = vmatprep.mubr.bf16.mxu0 0
        %510 = vmatmul.mubr.bf16.gmra.mrb[0].mxu0 %v456
        %v511 = vpop.f32.mrb[0].mxu0
        %v512 = vadd.f32 %v440, %v511
        %v513 = vpop.f32.mrb[0].mxu0
        %v514 = vpop.f32.mrb[0].mxu0
        %v515 = vadd.f32 %v440, %v514
        %v516 = vpop.f32.mrb[0].mxu0
        %517 = vmatprep.mubr.bf16.mxu0 0
        %518 = vmatmul.mubr.bf16.gmra.mrb[0].mxu0 %v459
        %v519 = vpop.f32.mrb[0].mxu0
        %v520 = vadd.f32 %v440, %v519
        %v521 = vpop.f32.mrb[0].mxu0
        %v522 = vpop.f32.mrb[0].mxu0
        %v523 = vadd.f32 %v440, %v522
        %v524 = vpop.f32.mrb[0].mxu0
        %525 = vdwg.mxu0
        %v526 = vmul.f32 %v496, 0.1
        %v527 = vmul.f32 %v499, 0.1
        %v528 = vmul.f32 %v504, 0.1
        %v529 = vmul.f32 %v507, 0.1
        %v530 = vmul.f32 %v512, 0.1
        %v531 = vmul.f32 %v515, 0.1
        %v532 = vmul.f32 %v520, 0.1
        %v533 = vmul.f32 %v523, 0.1
        %v534 = vmax.f32 %v496, %v526
        %v535 = vmax.f32 %v499, %v527
        %v536 = vmax.f32 %v504, %v528
        %v537 = vmax.f32 %v507, %v529
        %v538 = vmax.f32 %v512, %v530
        %v539 = vmax.f32 %v515, %v531
        %v540 = vmax.f32 %v520, %v532
        %v541 = vmax.f32 %v523, %v533
        %v542 = vpack.c.bf16 %v535, %v534
        %v543 = vpack.c.bf16 %v537, %v536
        %v544 = vpack.c.bf16 %v539, %v538
        %v545 = vpack.c.bf16 %v541, %v540
        %v546 = vld [vmem:[%s3] sm:$0xf]
        %v547 = vld [vmem:[%s3 + $0x4] sm:$0xf]
        %v548 = vld [vmem:[%s3 + $0x8] sm:$0xf]
        %v549 = vld [vmem:[%s3 + $0xc] sm:$0xf]
        %v550 = vld [vmem:[%s3 + $0x10] sm:$0xf]
        %v551 = vld [vmem:[%s3 + $0x14] sm:$0xf]
        %v552 = vld [vmem:[%s3 + $0x18] sm:$0xf]
        %v553 = vld [vmem:[%s3 + $0x1c] sm:$0xf]
        %v554 = vld [vmem:[%s3 + $0x20] sm:$0xf]
        %v555 = vld [vmem:[%s3 + $0x24] sm:$0xf]
        %v556 = vld [vmem:[%s3 + $0x28] sm:$0xf]
        %v557 = vld [vmem:[%s3 + $0x2c] sm:$0xf]
        %v558 = vld [vmem:[%s3 + $0x30] sm:$0xf]
        %v559 = vld [vmem:[%s3 + $0x34] sm:$0xf]
        %v560 = vld [vmem:[%s3 + $0x38] sm:$0xf]
        %v561 = vld [vmem:[%s3 + $0x3c] sm:$0xf]
        %v562 = vld [vmem:[%s4] sm:$0x1]
        %v564 = vlaneseq
        %v565 = vshrl.u32 %v564, 7
        %v566 = vsub.s32 0, %v565
        %v567 = vrot.slane %v562, %v566
        %v585 = vunpack.c.l.b16 %v546
        %v586 = vunpack.c.l.b16 %v547
        %v587 = vunpack.c.l.b16 %v548
        %v588 = vunpack.c.l.b16 %v549
        %v589 = vunpack.c.l.b16 %v550
        %v590 = vunpack.c.l.b16 %v551
        %v591 = vunpack.c.l.b16 %v552
        %v592 = vunpack.c.l.b16 %v553
        %v593 = vunpack.c.l.b16 %v554
        %v594 = vunpack.c.l.b16 %v555
        %v595 = vunpack.c.l.b16 %v556
        %v596 = vunpack.c.l.b16 %v557
        %v597 = vunpack.c.l.b16 %v558
        %v598 = vunpack.c.l.b16 %v559
        %v599 = vunpack.c.l.b16 %v560
        %v600 = vunpack.c.l.b16 %v561
        %v601 = vpack.c.b16 %v586, %v585
        %v602 = vpack.c.b16 %v588, %v587
        %v603 = vpack.c.b16 %v590, %v589
        %v604 = vpack.c.b16 %v592, %v591
        %v605 = vpack.c.b16 %v594, %v593
        %v606 = vpack.c.b16 %v596, %v595
        %v607 = vpack.c.b16 %v598, %v597
        %v608 = vpack.c.b16 %v600, %v599
        %617 = vmatprep.subr.bf16.mxu0 0
        %618 = vmatpush1.bf16.msra.mxu0 %v601
        %619 = vmatprep.subr.bf16.mxu0 0
        %620 = vmatpush1.bf16.msra.mxu0 %v602
        %621 = vmatprep.subr.bf16.mxu0 0
        %622 = vmatpush1.bf16.msra.mxu0 %v603
        %623 = vmatprep.subr.bf16.mxu0 0
        %624 = vmatpush1.bf16.msra.mxu0 %v604
        %625 = vmatprep.subr.bf16.mxu0 0
        %626 = vmatpush1.bf16.msra.mxu0 %v605
        %627 = vmatprep.subr.bf16.mxu0 0
        %628 = vmatpush1.bf16.msra.mxu0 %v606
        %629 = vmatprep.subr.bf16.mxu0 0
        %630 = vmatpush1.bf16.msra.mxu0 %v607
        %631 = vmatprep.subr.bf16.mxu0 0
        %632 = vmatpush1.bf16.msra.mxu0 %v608
        %633 = vmatprep.subr.bf16.mxu0 0
        %634 = vmatpush1.bf16.msra.mxu0 0
        %635 = vmatprep.subr.bf16.mxu0 0
        %636 = vmatpush1.bf16.msra.mxu0 0
        %637 = vmatprep.subr.bf16.mxu0 0
        %638 = vmatpush1.bf16.msra.mxu0 0
        %639 = vmatprep.subr.bf16.mxu0 0
        %640 = vmatpush1.bf16.msra.mxu0 0
        %641 = vmatprep.subr.bf16.mxu0 0
        %642 = vmatpush1.bf16.msra.mxu0 0
        %643 = vmatprep.subr.bf16.mxu0 0
        %644 = vmatpush1.bf16.msra.mxu0 0
        %645 = vmatprep.subr.bf16.mxu0 0
        %646 = vmatpush1.bf16.msra.mxu0 0
        %647 = vmatprep.subr.bf16.mxu0 0
        %648 = vmatpush1.bf16.msra.mxu0 0
        %649 = vmatprep.mubr.bf16.mxu0 0
        %650 = vmatmul.mubr.bf16.gmra.mrb[0].mxu0 %v542
        %v651 = vpop.f32.mrb[0].mxu0
        %v652 = vadd.f32 %v567, %v651
        %v653 = vpop.f32.mrb[0].mxu0
        %v654 = vpop.f32.mrb[0].mxu0
        %v655 = vadd.f32 %v567, %v654
        %v656 = vpop.f32.mrb[0].mxu0
        %657 = vmatprep.mubr.bf16.mxu0 0
        %658 = vmatmul.mubr.bf16.gmra.mrb[0].mxu0 %v543
        %v659 = vpop.f32.mrb[0].mxu0
        %v660 = vadd.f32 %v567, %v659
        %v661 = vpop.f32.mrb[0].mxu0
        %v662 = vpop.f32.mrb[0].mxu0
        %v663 = vadd.f32 %v567, %v662
        %v664 = vpop.f32.mrb[0].mxu0
        %665 = vmatprep.mubr.bf16.mxu0 0
        %666 = vmatmul.mubr.bf16.gmra.mrb[0].mxu0 %v544
        %v667 = vpop.f32.mrb[0].mxu0
        %v668 = vadd.f32 %v567, %v667
        %v669 = vpop.f32.mrb[0].mxu0
        %v670 = vpop.f32.mrb[0].mxu0
        %v671 = vadd.f32 %v567, %v670
        %v672 = vpop.f32.mrb[0].mxu0
        %673 = vmatprep.mubr.bf16.mxu0 0
        %674 = vmatmul.mubr.bf16.gmra.mrb[0].mxu0 %v545
        %v675 = vpop.f32.mrb[0].mxu0
        %v676 = vadd.f32 %v567, %v675
        %v677 = vpop.f32.mrb[0].mxu0
        %v678 = vpop.f32.mrb[0].mxu0
        %v679 = vadd.f32 %v567, %v678
        %v680 = vpop.f32.mrb[0].mxu0
        %681 = vdwg.mxu0
        %v682 = vmul.f32 %v652, 0.1
        %v683 = vmul.f32 %v655, 0.1
        %v684 = vmul.f32 %v660, 0.1
        %v685 = vmul.f32 %v663, 0.1
        %v686 = vmul.f32 %v668, 0.1
        %v687 = vmul.f32 %v671, 0.1
        %v688 = vmul.f32 %v676, 0.1
        %v689 = vmul.f32 %v679, 0.1
        %v690 = vmax.f32 %v652, %v682
        %v691 = vmax.f32 %v655, %v683
        %v692 = vmax.f32 %v660, %v684
        %v693 = vmax.f32 %v663, %v685
        %v694 = vmax.f32 %v668, %v686
        %v695 = vmax.f32 %v671, %v687
        %v696 = vmax.f32 %v676, %v688
        %v697 = vmax.f32 %v679, %v689
        %v698 = vpack.c.bf16 %v691, %v690
        %v699 = vpack.c.bf16 %v693, %v692
        %v700 = vpack.c.bf16 %v695, %v694
        %v701 = vpack.c.bf16 %v697, %v696
        %v702 = vld [vmem:[#allocation2] sm:$0xf]
        %v703 = vld [vmem:[#allocation2 + $0x4] sm:$0xf]
        %v704 = vld [vmem:[#allocation2 + $0x8] sm:$0xf]
        %v705 = vld [vmem:[#allocation2 + $0xc] sm:$0xf]
        %v706 = vld [vmem:[#allocation2 + $0x10] sm:$0xf]
        %v707 = vld [vmem:[#allocation2 + $0x14] sm:$0xf]
        %v708 = vld [vmem:[#allocation2 + $0x18] sm:$0xf]
        %v709 = vld [vmem:[#allocation2 + $0x1c] sm:$0xf]
        %v710 = vld [vmem:[#allocation2 + $0x20] sm:$0xf]
        %v711 = vld [vmem:[#allocation2 + $0x24] sm:$0xf]
        %v712 = vld [vmem:[#allocation2 + $0x28] sm:$0xf]
        %v713 = vld [vmem:[#allocation2 + $0x2c] sm:$0xf]
        %v714 = vld [vmem:[#allocation2 + $0x30] sm:$0xf]
        %v715 = vld [vmem:[#allocation2 + $0x34] sm:$0xf]
        %v716 = vld [vmem:[#allocation2 + $0x38] sm:$0xf]
        %v717 = vld [vmem:[#allocation2 + $0x3c] sm:$0xf]
        %v718 = vld [vmem:[%s6] sm:$0x1]
        %v720 = vlaneseq
        %v721 = vshrl.u32 %v720, 7
        %v722 = vsub.s32 0, %v721
        %v723 = vrot.slane %v718, %v722
        %v741 = vunpack.c.l.b16 %v702
        %v742 = vunpack.c.l.b16 %v703
        %v743 = vunpack.c.l.b16 %v704
        %v744 = vunpack.c.l.b16 %v705
        %v745 = vunpack.c.l.b16 %v706
        %v746 = vunpack.c.l.b16 %v707
        %v747 = vunpack.c.l.b16 %v708
        %v748 = vunpack.c.l.b16 %v709
        %v749 = vunpack.c.l.b16 %v710
        %v750 = vunpack.c.l.b16 %v711
        %v751 = vunpack.c.l.b16 %v712
        %v752 = vunpack.c.l.b16 %v713
        %v753 = vunpack.c.l.b16 %v714
        %v754 = vunpack.c.l.b16 %v715
        %v755 = vunpack.c.l.b16 %v716
        %v756 = vunpack.c.l.b16 %v717
        %v757 = vpack.c.b16 %v742, %v741
        %v758 = vpack.c.b16 %v744, %v743
        %v759 = vpack.c.b16 %v746, %v745
        %v760 = vpack.c.b16 %v748, %v747
        %v761 = vpack.c.b16 %v750, %v749
        %v762 = vpack.c.b16 %v752, %v751
        %v763 = vpack.c.b16 %v754, %v753
        %v764 = vpack.c.b16 %v756, %v755
        %773 = vmatprep.subr.bf16.mxu0 0
        %774 = vmatpush1.bf16.msra.mxu0 %v757
        %775 = vmatprep.subr.bf16.mxu0 0
        %776 = vmatpush1.bf16.msra.mxu0 %v758
        %777 = vmatprep.subr.bf16.mxu0 0
        %778 = vmatpush1.bf16.msra.mxu0 %v759
        %779 = vmatprep.subr.bf16.mxu0 0
        %780 = vmatpush1.bf16.msra.mxu0 %v760
        %781 = vmatprep.subr.bf16.mxu0 0
        %782 = vmatpush1.bf16.msra.mxu0 %v761
        %783 = vmatprep.subr.bf16.mxu0 0
        %784 = vmatpush1.bf16.msra.mxu0 %v762
        %785 = vmatprep.subr.bf16.mxu0 0
        %786 = vmatpush1.bf16.msra.mxu0 %v763
        %787 = vmatprep.subr.bf16.mxu0 0
        %788 = vmatpush1.bf16.msra.mxu0 %v764
        %789 = vmatprep.subr.bf16.mxu0 0
        %790 = vmatpush1.bf16.msra.mxu0 0
        %791 = vmatprep.subr.bf16.mxu0 0
        %792 = vmatpush1.bf16.msra.mxu0 0
        %793 = vmatprep.subr.bf16.mxu0 0
        %794 = vmatpush1.bf16.msra.mxu0 0
        %795 = vmatprep.subr.bf16.mxu0 0
        %796 = vmatpush1.bf16.msra.mxu0 0
        %797 = vmatprep.subr.bf16.mxu0 0
        %798 = vmatpush1.bf16.msra.mxu0 0
        %799 = vmatprep.subr.bf16.mxu0 0
        %800 = vmatpush1.bf16.msra.mxu0 0
        %801 = vmatprep.subr.bf16.mxu0 0
        %802 = vmatpush1.bf16.msra.mxu0 0
        %803 = vmatprep.subr.bf16.mxu0 0
        %804 = vmatpush1.bf16.msra.mxu0 0
        %805 = vmatprep.mubr.bf16.mxu0 0
        %806 = vmatmul.mubr.bf16.gmra.mrb[0].mxu0 %v698
        %v807 = vpop.f32.mrb[0].mxu0
        %v808 = vadd.f32 %v723, %v807
        %v809 = vpop.f32.mrb[0].mxu0
        %v810 = vpop.f32.mrb[0].mxu0
        %v811 = vadd.f32 %v723, %v810
        %v812 = vpop.f32.mrb[0].mxu0
        %813 = vmatprep.mubr.bf16.mxu0 0
        %814 = vmatmul.mubr.bf16.gmra.mrb[0].mxu0 %v699
        %v815 = vpop.f32.mrb[0].mxu0
        %v816 = vadd.f32 %v723, %v815
        %v817 = vpop.f32.mrb[0].mxu0
        %v818 = vpop.f32.mrb[0].mxu0
        %v819 = vadd.f32 %v723, %v818
        %v820 = vpop.f32.mrb[0].mxu0
        %821 = vmatprep.mubr.bf16.mxu0 0
        %822 = vmatmul.mubr.bf16.gmra.mrb[0].mxu0 %v700
        %v823 = vpop.f32.mrb[0].mxu0
        %v824 = vadd.f32 %v723, %v823
        %v825 = vpop.f32.mrb[0].mxu0
        %v826 = vpop.f32.mrb[0].mxu0
        %v827 = vadd.f32 %v723, %v826
        %v828 = vpop.f32.mrb[0].mxu0
        %829 = vmatprep.mubr.bf16.mxu0 0
        %830 = vmatmul.mubr.bf16.gmra.mrb[0].mxu0 %v701
        %v831 = vpop.f32.mrb[0].mxu0
        %v832 = vadd.f32 %v723, %v831
        %v833 = vpop.f32.mrb[0].mxu0
        %v834 = vpop.f32.mrb[0].mxu0
        %v835 = vadd.f32 %v723, %v834
        %v836 = vpop.f32.mrb[0].mxu0
        %837 = vdwg.mxu0
        %v838 = vadd.f32 %v808, %v534
        %v839 = vadd.f32 %v811, %v535
        %v840 = vadd.f32 %v816, %v536
        %v841 = vadd.f32 %v819, %v537
        %v842 = vadd.f32 %v824, %v538
        %v843 = vadd.f32 %v827, %v539
        %v844 = vadd.f32 %v832, %v540
        %v845 = vadd.f32 %v835, %v541
        %v846 = vmul.f32 %v838, 0.1
        %v847 = vmul.f32 %v839, 0.1
        %v848 = vmul.f32 %v840, 0.1
        %v849 = vmul.f32 %v841, 0.1
        %v850 = vmul.f32 %v842, 0.1
        %v851 = vmul.f32 %v843, 0.1
        %v852 = vmul.f32 %v844, 0.1
        %v853 = vmul.f32 %v845, 0.1
        %v854 = vmax.f32 %v838, %v846
        %v855 = vmax.f32 %v839, %v847
        %v856 = vmax.f32 %v840, %v848
        %v857 = vmax.f32 %v841, %v849
        %v858 = vmax.f32 %v842, %v850
        %v859 = vmax.f32 %v843, %v851
        %v860 = vmax.f32 %v844, %v852
        %v861 = vmax.f32 %v845, %v853
        %v862 = vpack.c.bf16 %v855, %v854
        %v863 = vpack.c.bf16 %v857, %v856
        %v864 = vpack.c.bf16 %v859, %v858
        %v865 = vpack.c.bf16 %v861, %v860
        %s866 = scalar_lea.vmem %s3, 64
        %v867 = vld [vmem:[%s866] sm:$0xf]
        %v868 = vld [vmem:[%s866 + $0x4] sm:$0xf]
        %v869 = vld [vmem:[%s866 + $0x8] sm:$0xf]
        %v870 = vld [vmem:[%s866 + $0xc] sm:$0xf]
        %v871 = vld [vmem:[%s866 + $0x10] sm:$0xf]
        %v872 = vld [vmem:[%s866 + $0x14] sm:$0xf]
        %v873 = vld [vmem:[%s866 + $0x18] sm:$0xf]
        %v874 = vld [vmem:[%s866 + $0x1c] sm:$0xf]
        %v875 = vld [vmem:[%s866 + $0x20] sm:$0xf]
        %v876 = vld [vmem:[%s866 + $0x24] sm:$0xf]
        %v877 = vld [vmem:[%s866 + $0x28] sm:$0xf]
        %v878 = vld [vmem:[%s866 + $0x2c] sm:$0xf]
        %v879 = vld [vmem:[%s866 + $0x30] sm:$0xf]
        %v880 = vld [vmem:[%s866 + $0x34] sm:$0xf]
        %v881 = vld [vmem:[%s866 + $0x38] sm:$0xf]
        %v882 = vld [vmem:[%s866 + $0x3c] sm:$0xf]
        %s883 = scalar_lea.vmem %s4, 1
        %v884 = vld [vmem:[%s883] sm:$0x1]
        %v886 = vlaneseq
        %v887 = vshrl.u32 %v886, 7
        %v888 = vsub.s32 0, %v887
        %v889 = vrot.slane %v884, %v888
        %v907 = vunpack.c.l.b16 %v867
        %v908 = vunpack.c.l.b16 %v868
        %v909 = vunpack.c.l.b16 %v869
        %v910 = vunpack.c.l.b16 %v870
        %v911 = vunpack.c.l.b16 %v871
        %v912 = vunpack.c.l.b16 %v872
        %v913 = vunpack.c.l.b16 %v873
        %v914 = vunpack.c.l.b16 %v874
        %v915 = vunpack.c.l.b16 %v875
        %v916 = vunpack.c.l.b16 %v876
        %v917 = vunpack.c.l.b16 %v877
        %v918 = vunpack.c.l.b16 %v878
        %v919 = vunpack.c.l.b16 %v879
        %v920 = vunpack.c.l.b16 %v880
        %v921 = vunpack.c.l.b16 %v881
        %v922 = vunpack.c.l.b16 %v882
        %v923 = vpack.c.b16 %v908, %v907
        %v924 = vpack.c.b16 %v910, %v909
        %v925 = vpack.c.b16 %v912, %v911
        %v926 = vpack.c.b16 %v914, %v913
        %v927 = vpack.c.b16 %v916, %v915
        %v928 = vpack.c.b16 %v918, %v917
        %v929 = vpack.c.b16 %v920, %v919
        %v930 = vpack.c.b16 %v922, %v921
        %939 = vmatprep.subr.bf16.mxu0 0
        %940 = vmatpush1.bf16.msra.mxu0 %v923
        %941 = vmatprep.subr.bf16.mxu0 0
        %942 = vmatpush1.bf16.msra.mxu0 %v924
        %943 = vmatprep.subr.bf16.mxu0 0
        %944 = vmatpush1.bf16.msra.mxu0 %v925
        %945 = vmatprep.subr.bf16.mxu0 0
        %946 = vmatpush1.bf16.msra.mxu0 %v926
        %947 = vmatprep.subr.bf16.mxu0 0
        %948 = vmatpush1.bf16.msra.mxu0 %v927
        %949 = vmatprep.subr.bf16.mxu0 0
        %950 = vmatpush1.bf16.msra.mxu0 %v928
        %951 = vmatprep.subr.bf16.mxu0 0
        %952 = vmatpush1.bf16.msra.mxu0 %v929
        %953 = vmatprep.subr.bf16.mxu0 0
        %954 = vmatpush1.bf16.msra.mxu0 %v930
        %955 = vmatprep.subr.bf16.mxu0 0
        %956 = vmatpush1.bf16.msra.mxu0 0
        %957 = vmatprep.subr.bf16.mxu0 0
        %958 = vmatpush1.bf16.msra.mxu0 0
        %959 = vmatprep.subr.bf16.mxu0 0
        %960 = vmatpush1.bf16.msra.mxu0 0
        %961 = vmatprep.subr.bf16.mxu0 0
        %962 = vmatpush1.bf16.msra.mxu0 0
        %963 = vmatprep.subr.bf16.mxu0 0
        %964 = vmatpush1.bf16.msra.mxu0 0
        %965 = vmatprep.subr.bf16.mxu0 0
        %966 = vmatpush1.bf16.msra.mxu0 0
        %967 = vmatprep.subr.bf16.mxu0 0
        %968 = vmatpush1.bf16.msra.mxu0 0
        %969 = vmatprep.subr.bf16.mxu0 0
        %970 = vmatpush1.bf16.msra.mxu0 0
        %971 = vmatprep.mubr.bf16.mxu0 0
        %972 = vmatmul.mubr.bf16.gmra.mrb[0].mxu0 %v862
        %v973 = vpop.f32.mrb[0].mxu0
        %v974 = vadd.f32 %v889, %v973
        %v975 = vpop.f32.mrb[0].mxu0
        %v976 = vpop.f32.mrb[0].mxu0
        %v977 = vadd.f32 %v889, %v976
        %v978 = vpop.f32.mrb[0].mxu0
        %979 = vmatprep.mubr.bf16.mxu0 0
        %980 = vmatmul.mubr.bf16.gmra.mrb[0].mxu0 %v863
        %v981 = vpop.f32.mrb[0].mxu0
        %v982 = vadd.f32 %v889, %v981
        %v983 = vpop.f32.mrb[0].mxu0
        %v984 = vpop.f32.mrb[0].mxu0
        %v985 = vadd.f32 %v889, %v984
        %v986 = vpop.f32.mrb[0].mxu0
        %987 = vmatprep.mubr.bf16.mxu0 0
        %988 = vmatmul.mubr.bf16.gmra.mrb[0].mxu0 %v864
        %v989 = vpop.f32.mrb[0].mxu0
        %v990 = vadd.f32 %v889, %v989
        %v991 = vpop.f32.mrb[0].mxu0
        %v992 = vpop.f32.mrb[0].mxu0
        %v993 = vadd.f32 %v889, %v992
        %v994 = vpop.f32.mrb[0].mxu0
        %995 = vmatprep.mubr.bf16.mxu0 0
        %996 = vmatmul.mubr.bf16.gmra.mrb[0].mxu0 %v865
        %v997 = vpop.f32.mrb[0].mxu0
        %v998 = vadd.f32 %v889, %v997
        %v999 = vpop.f32.mrb[0].mxu0
        %v1000 = vpop.f32.mrb[0].mxu0
        %v1001 = vadd.f32 %v889, %v1000
        %v1002 = vpop.f32.mrb[0].mxu0
        %1003 = vdwg.mxu0
        %v1004 = vmul.f32 %v974, 0.1
        %v1005 = vmul.f32 %v977, 0.1
        %v1006 = vmul.f32 %v982, 0.1
        %v1007 = vmul.f32 %v985, 0.1
        %v1008 = vmul.f32 %v990, 0.1
        %v1009 = vmul.f32 %v993, 0.1
        %v1010 = vmul.f32 %v998, 0.1
        %v1011 = vmul.f32 %v1001, 0.1
        %v1012 = vmax.f32 %v974, %v1004
        %v1013 = vmax.f32 %v977, %v1005
        %v1014 = vmax.f32 %v982, %v1006
        %v1015 = vmax.f32 %v985, %v1007
        %v1016 = vmax.f32 %v990, %v1008
        %v1017 = vmax.f32 %v993, %v1009
        %v1018 = vmax.f32 %v998, %v1010
        %v1019 = vmax.f32 %v1001, %v1011
        %v1020 = vpack.c.bf16 %v1013, %v1012
        %v1021 = vpack.c.bf16 %v1015, %v1014
        %v1022 = vpack.c.bf16 %v1017, %v1016
        %v1023 = vpack.c.bf16 %v1019, %v1018
        %s1024 = scalar_lea.vmem [#allocation2], 64
        %v1025 = vld [vmem:[%s1024] sm:$0xf]
        %v1026 = vld [vmem:[%s1024 + $0x4] sm:$0xf]
        %v1027 = vld [vmem:[%s1024 + $0x8] sm:$0xf]
        %v1028 = vld [vmem:[%s1024 + $0xc] sm:$0xf]
        %v1029 = vld [vmem:[%s1024 + $0x10] sm:$0xf]
        %v1030 = vld [vmem:[%s1024 + $0x14] sm:$0xf]
        %v1031 = vld [vmem:[%s1024 + $0x18] sm:$0xf]
        %v1032 = vld [vmem:[%s1024 + $0x1c] sm:$0xf]
        %v1033 = vld [vmem:[%s1024 + $0x20] sm:$0xf]
        %v1034 = vld [vmem:[%s1024 + $0x24] sm:$0xf]
        %v1035 = vld [vmem:[%s1024 + $0x28] sm:$0xf]
        %v1036 = vld [vmem:[%s1024 + $0x2c] sm:$0xf]
        %v1037 = vld [vmem:[%s1024 + $0x30] sm:$0xf]
        %v1038 = vld [vmem:[%s1024 + $0x34] sm:$0xf]
        %v1039 = vld [vmem:[%s1024 + $0x38] sm:$0xf]
        %v1040 = vld [vmem:[%s1024 + $0x3c] sm:$0xf]
        %s1041 = scalar_lea.vmem %s6, 1
        %v1042 = vld [vmem:[%s1041] sm:$0x1]
        %v1044 = vlaneseq
        %v1045 = vshrl.u32 %v1044, 7
        %v1046 = vsub.s32 0, %v1045
        %v1047 = vrot.slane %v1042, %v1046
        %v1065 = vunpack.c.l.b16 %v1025
        %v1066 = vunpack.c.l.b16 %v1026
        %v1067 = vunpack.c.l.b16 %v1027
        %v1068 = vunpack.c.l.b16 %v1028
        %v1069 = vunpack.c.l.b16 %v1029
        %v1070 = vunpack.c.l.b16 %v1030
        %v1071 = vunpack.c.l.b16 %v1031
        %v1072 = vunpack.c.l.b16 %v1032
        %v1073 = vunpack.c.l.b16 %v1033
        %v1074 = vunpack.c.l.b16 %v1034
        %v1075 = vunpack.c.l.b16 %v1035
        %v1076 = vunpack.c.l.b16 %v1036
        %v1077 = vunpack.c.l.b16 %v1037
        %v1078 = vunpack.c.l.b16 %v1038
        %v1079 = vunpack.c.l.b16 %v1039
        %v1080 = vunpack.c.l.b16 %v1040
        %v1081 = vpack.c.b16 %v1066, %v1065
        %v1082 = vpack.c.b16 %v1068, %v1067
        %v1083 = vpack.c.b16 %v1070, %v1069
        %v1084 = vpack.c.b16 %v1072, %v1071
        %v1085 = vpack.c.b16 %v1074, %v1073
        %v1086 = vpack.c.b16 %v1076, %v1075
        %v1087 = vpack.c.b16 %v1078, %v1077
        %v1088 = vpack.c.b16 %v1080, %v1079
        %1097 = vmatprep.subr.bf16.mxu0 0
        %1098 = vmatpush1.bf16.msra.mxu0 %v1081
        %1099 = vmatprep.subr.bf16.mxu0 0
        %1100 = vmatpush1.bf16.msra.mxu0 %v1082
        %1101 = vmatprep.subr.bf16.mxu0 0
        %1102 = vmatpush1.bf16.msra.mxu0 %v1083
        %1103 = vmatprep.subr.bf16.mxu0 0
        %1104 = vmatpush1.bf16.msra.mxu0 %v1084
        %1105 = vmatprep.subr.bf16.mxu0 0
        %1106 = vmatpush1.bf16.msra.mxu0 %v1085
        %1107 = vmatprep.subr.bf16.mxu0 0
        %1108 = vmatpush1.bf16.msra.mxu0 %v1086
        %1109 = vmatprep.subr.bf16.mxu0 0
        %1110 = vmatpush1.bf16.msra.mxu0 %v1087
        %1111 = vmatprep.subr.bf16.mxu0 0
        %1112 = vmatpush1.bf16.msra.mxu0 %v1088
        %1113 = vmatprep.subr.bf16.mxu0 0
        %1114 = vmatpush1.bf16.msra.mxu0 0
        %1115 = vmatprep.subr.bf16.mxu0 0
        %1116 = vmatpush1.bf16.msra.mxu0 0
        %1117 = vmatprep.subr.bf16.mxu0 0
        %1118 = vmatpush1.bf16.msra.mxu0 0
        %1119 = vmatprep.subr.bf16.mxu0 0
        %1120 = vmatpush1.bf16.msra.mxu0 0
        %1121 = vmatprep.subr.bf16.mxu0 0
        %1122 = vmatpush1.bf16.msra.mxu0 0
        %1123 = vmatprep.subr.bf16.mxu0 0
        %1124 = vmatpush1.bf16.msra.mxu0 0
        %1125 = vmatprep.subr.bf16.mxu0 0
        %1126 = vmatpush1.bf16.msra.mxu0 0
        %1127 = vmatprep.subr.bf16.mxu0 0
        %1128 = vmatpush1.bf16.msra.mxu0 0
        %1129 = vmatprep.mubr.bf16.mxu0 0
        %1130 = vmatmul.mubr.bf16.gmra.mrb[0].mxu0 %v1020
        %v1131 = vpop.f32.mrb[0].mxu0
        %v1132 = vadd.f32 %v1047, %v1131
        %v1133 = vpop.f32.mrb[0].mxu0
        %v1134 = vpop.f32.mrb[0].mxu0
        %v1135 = vadd.f32 %v1047, %v1134
        %v1136 = vpop.f32.mrb[0].mxu0
        %1137 = vmatprep.mubr.bf16.mxu0 0
        %1138 = vmatmul.mubr.bf16.gmra.mrb[0].mxu0 %v1021
        %v1139 = vpop.f32.mrb[0].mxu0
        %v1140 = vadd.f32 %v1047, %v1139
        %v1141 = vpop.f32.mrb[0].mxu0
        %v1142 = vpop.f32.mrb[0].mxu0
        %v1143 = vadd.f32 %v1047, %v1142
        %v1144 = vpop.f32.mrb[0].mxu0
        %1145 = vmatprep.mubr.bf16.mxu0 0
        %1146 = vmatmul.mubr.bf16.gmra.mrb[0].mxu0 %v1022
        %v1147 = vpop.f32.mrb[0].mxu0
        %v1148 = vadd.f32 %v1047, %v1147
        %v1149 = vpop.f32.mrb[0].mxu0
        %v1150 = vpop.f32.mrb[0].mxu0
        %v1151 = vadd.f32 %v1047, %v1150
        %v1152 = vpop.f32.mrb[0].mxu0
        %1153 = vmatprep.mubr.bf16.mxu0 0
        %1154 = vmatmul.mubr.bf16.gmra.mrb[0].mxu0 %v1023
        %v1155 = vpop.f32.mrb[0].mxu0
        %v1156 = vadd.f32 %v1047, %v1155
        %v1157 = vpop.f32.mrb[0].mxu0
        %v1158 = vpop.f32.mrb[0].mxu0
        %v1159 = vadd.f32 %v1047, %v1158
        %v1160 = vpop.f32.mrb[0].mxu0
        %1161 = vdwg.mxu0
        %v1162 = vadd.f32 %v1132, %v854
        %v1163 = vadd.f32 %v1135, %v855
        %v1164 = vadd.f32 %v1140, %v856
        %v1165 = vadd.f32 %v1143, %v857
        %v1166 = vadd.f32 %v1148, %v858
        %v1167 = vadd.f32 %v1151, %v859
        %v1168 = vadd.f32 %v1156, %v860
        %v1169 = vadd.f32 %v1159, %v861
        %v1170 = vmul.f32 %v1162, 0.1
        %v1171 = vmul.f32 %v1163, 0.1
        %v1172 = vmul.f32 %v1164, 0.1
        %v1173 = vmul.f32 %v1165, 0.1
        %v1174 = vmul.f32 %v1166, 0.1
        %v1175 = vmul.f32 %v1167, 0.1
        %v1176 = vmul.f32 %v1168, 0.1
        %v1177 = vmul.f32 %v1169, 0.1
        %v1178 = vmax.f32 %v1162, %v1170
        %v1179 = vmax.f32 %v1163, %v1171
        %v1180 = vmax.f32 %v1164, %v1172
        %v1181 = vmax.f32 %v1165, %v1173
        %v1182 = vmax.f32 %v1166, %v1174
        %v1183 = vmax.f32 %v1167, %v1175
        %v1184 = vmax.f32 %v1168, %v1176
        %v1185 = vmax.f32 %v1169, %v1177
        %v1186 = vpack.c.bf16 %v1179, %v1178
        %v1187 = vpack.c.bf16 %v1181, %v1180
        %v1188 = vpack.c.bf16 %v1183, %v1182
        %v1189 = vpack.c.bf16 %v1185, %v1184
        %s1190 = scalar_lea.vmem %s3, 128
        %v1191 = vld [vmem:[%s1190] sm:$0xf]
        %v1192 = vld [vmem:[%s1190 + $0x4] sm:$0xf]
        %v1193 = vld [vmem:[%s1190 + $0x8] sm:$0xf]
        %v1194 = vld [vmem:[%s1190 + $0xc] sm:$0xf]
        %v1195 = vld [vmem:[%s1190 + $0x10] sm:$0xf]
        %v1196 = vld [vmem:[%s1190 + $0x14] sm:$0xf]
        %v1197 = vld [vmem:[%s1190 + $0x18] sm:$0xf]
        %v1198 = vld [vmem:[%s1190 + $0x1c] sm:$0xf]
        %v1199 = vld [vmem:[%s1190 + $0x20] sm:$0xf]
        %v1200 = vld [vmem:[%s1190 + $0x24] sm:$0xf]
        %v1201 = vld [vmem:[%s1190 + $0x28] sm:$0xf]
        %v1202 = vld [vmem:[%s1190 + $0x2c] sm:$0xf]
        %v1203 = vld [vmem:[%s1190 + $0x30] sm:$0xf]
        %v1204 = vld [vmem:[%s1190 + $0x34] sm:$0xf]
        %v1205 = vld [vmem:[%s1190 + $0x38] sm:$0xf]
        %v1206 = vld [vmem:[%s1190 + $0x3c] sm:$0xf]
        %s1207 = scalar_lea.vmem %s4, 2
        %v1208 = vld [vmem:[%s1207] sm:$0x1]
        %v1210 = vlaneseq
        %v1211 = vshrl.u32 %v1210, 7
        %v1212 = vsub.s32 0, %v1211
        %v1213 = vrot.slane %v1208, %v1212
        %v1231 = vunpack.c.l.b16 %v1191
        %v1232 = vunpack.c.l.b16 %v1192
        %v1233 = vunpack.c.l.b16 %v1193
        %v1234 = vunpack.c.l.b16 %v1194
        %v1235 = vunpack.c.l.b16 %v1195
        %v1236 = vunpack.c.l.b16 %v1196
        %v1237 = vunpack.c.l.b16 %v1197
        %v1238 = vunpack.c.l.b16 %v1198
        %v1239 = vunpack.c.l.b16 %v1199
        %v1240 = vunpack.c.l.b16 %v1200
        %v1241 = vunpack.c.l.b16 %v1201
        %v1242 = vunpack.c.l.b16 %v1202
        %v1243 = vunpack.c.l.b16 %v1203
        %v1244 = vunpack.c.l.b16 %v1204
        %v1245 = vunpack.c.l.b16 %v1205
        %v1246 = vunpack.c.l.b16 %v1206
        %v1247 = vpack.c.b16 %v1232, %v1231
        %v1248 = vpack.c.b16 %v1234, %v1233
        %v1249 = vpack.c.b16 %v1236, %v1235
        %v1250 = vpack.c.b16 %v1238, %v1237
        %v1251 = vpack.c.b16 %v1240, %v1239
        %v1252 = vpack.c.b16 %v1242, %v1241
        %v1253 = vpack.c.b16 %v1244, %v1243
        %v1254 = vpack.c.b16 %v1246, %v1245
        %1263 = vmatprep.subr.bf16.mxu0 0
        %1264 = vmatpush1.bf16.msra.mxu0 %v1247
        %1265 = vmatprep.subr.bf16.mxu0 0
        %1266 = vmatpush1.bf16.msra.mxu0 %v1248
        %1267 = vmatprep.subr.bf16.mxu0 0
        %1268 = vmatpush1.bf16.msra.mxu0 %v1249
        %1269 = vmatprep.subr.bf16.mxu0 0
        %1270 = vmatpush1.bf16.msra.mxu0 %v1250
        %1271 = vmatprep.subr.bf16.mxu0 0
        %1272 = vmatpush1.bf16.msra.mxu0 %v1251
        %1273 = vmatprep.subr.bf16.mxu0 0
        %1274 = vmatpush1.bf16.msra.mxu0 %v1252
        %1275 = vmatprep.subr.bf16.mxu0 0
        %1276 = vmatpush1.bf16.msra.mxu0 %v1253
        %1277 = vmatprep.subr.bf16.mxu0 0
        %1278 = vmatpush1.bf16.msra.mxu0 %v1254
        %1279 = vmatprep.subr.bf16.mxu0 0
        %1280 = vmatpush1.bf16.msra.mxu0 0
        %1281 = vmatprep.subr.bf16.mxu0 0
        %1282 = vmatpush1.bf16.msra.mxu0 0
        %1283 = vmatprep.subr.bf16.mxu0 0
        %1284 = vmatpush1.bf16.msra.mxu0 0
        %1285 = vmatprep.subr.bf16.mxu0 0
        %1286 = vmatpush1.bf16.msra.mxu0 0
        %1287 = vmatprep.subr.bf16.mxu0 0
        %1288 = vmatpush1.bf16.msra.mxu0 0
        %1289 = vmatprep.subr.bf16.mxu0 0
        %1290 = vmatpush1.bf16.msra.mxu0 0
        %1291 = vmatprep.subr.bf16.mxu0 0
        %1292 = vmatpush1.bf16.msra.mxu0 0
        %1293 = vmatprep.subr.bf16.mxu0 0
        %1294 = vmatpush1.bf16.msra.mxu0 0
        %1295 = vmatprep.mubr.bf16.mxu0 0
        %1296 = vmatmul.mubr.bf16.gmra.mrb[0].mxu0 %v1186
        %v1297 = vpop.f32.mrb[0].mxu0
        %v1298 = vadd.f32 %v1213, %v1297
        %v1299 = vpop.f32.mrb[0].mxu0
        %v1300 = vpop.f32.mrb[0].mxu0
        %v1301 = vadd.f32 %v1213, %v1300
        %v1302 = vpop.f32.mrb[0].mxu0
        %1303 = vmatprep.mubr.bf16.mxu0 0
        %1304 = vmatmul.mubr.bf16.gmra.mrb[0].mxu0 %v1187
        %v1305 = vpop.f32.mrb[0].mxu0
        %v1306 = vadd.f32 %v1213, %v1305
        %v1307 = vpop.f32.mrb[0].mxu0
        %v1308 = vpop.f32.mrb[0].mxu0
        %v1309 = vadd.f32 %v1213, %v1308
        %v1310 = vpop.f32.mrb[0].mxu0
        %1311 = vmatprep.mubr.bf16.mxu0 0
        %1312 = vmatmul.mubr.bf16.gmra.mrb[0].mxu0 %v1188
        %v1313 = vpop.f32.mrb[0].mxu0
        %v1314 = vadd.f32 %v1213, %v1313
        %v1315 = vpop.f32.mrb[0].mxu0
        %v1316 = vpop.f32.mrb[0].mxu0
        %v1317 = vadd.f32 %v1213, %v1316
        %v1318 = vpop.f32.mrb[0].mxu0
        %1319 = vmatprep.mubr.bf16.mxu0 0
        %1320 = vmatmul.mubr.bf16.gmra.mrb[0].mxu0 %v1189
        %v1321 = vpop.f32.mrb[0].mxu0
        %v1322 = vadd.f32 %v1213, %v1321
        %v1323 = vpop.f32.mrb[0].mxu0
        %v1324 = vpop.f32.mrb[0].mxu0
        %v1325 = vadd.f32 %v1213, %v1324
        %v1326 = vpop.f32.mrb[0].mxu0
        %1327 = vdwg.mxu0
        %v1328 = vmul.f32 %v1298, 0.1
        %v1329 = vmul.f32 %v1301, 0.1
        %v1330 = vmul.f32 %v1306, 0.1
        %v1331 = vmul.f32 %v1309, 0.1
        %v1332 = vmul.f32 %v1314, 0.1
        %v1333 = vmul.f32 %v1317, 0.1
        %v1334 = vmul.f32 %v1322, 0.1
        %v1335 = vmul.f32 %v1325, 0.1
        %v1336 = vmax.f32 %v1298, %v1328
        %v1337 = vmax.f32 %v1301, %v1329
        %v1338 = vmax.f32 %v1306, %v1330
        %v1339 = vmax.f32 %v1309, %v1331
        %v1340 = vmax.f32 %v1314, %v1332
        %v1341 = vmax.f32 %v1317, %v1333
        %v1342 = vmax.f32 %v1322, %v1334
        %v1343 = vmax.f32 %v1325, %v1335
        %v1344 = vpack.c.bf16 %v1337, %v1336
        %v1345 = vpack.c.bf16 %v1339, %v1338
        %v1346 = vpack.c.bf16 %v1341, %v1340
        %v1347 = vpack.c.bf16 %v1343, %v1342
        %s1348 = scalar_lea.vmem [#allocation2], 128
        %v1349 = vld [vmem:[%s1348] sm:$0xf]
        %v1350 = vld [vmem:[%s1348 + $0x4] sm:$0xf]
        %v1351 = vld [vmem:[%s1348 + $0x8] sm:$0xf]
        %v1352 = vld [vmem:[%s1348 + $0xc] sm:$0xf]
        %v1353 = vld [vmem:[%s1348 + $0x10] sm:$0xf]
        %v1354 = vld [vmem:[%s1348 + $0x14] sm:$0xf]
        %v1355 = vld [vmem:[%s1348 + $0x18] sm:$0xf]
        %v1356 = vld [vmem:[%s1348 + $0x1c] sm:$0xf]
        %v1357 = vld [vmem:[%s1348 + $0x20] sm:$0xf]
        %v1358 = vld [vmem:[%s1348 + $0x24] sm:$0xf]
        %v1359 = vld [vmem:[%s1348 + $0x28] sm:$0xf]
        %v1360 = vld [vmem:[%s1348 + $0x2c] sm:$0xf]
        %v1361 = vld [vmem:[%s1348 + $0x30] sm:$0xf]
        %v1362 = vld [vmem:[%s1348 + $0x34] sm:$0xf]
        %v1363 = vld [vmem:[%s1348 + $0x38] sm:$0xf]
        %v1364 = vld [vmem:[%s1348 + $0x3c] sm:$0xf]
        %s1365 = scalar_lea.vmem %s6, 2
        %v1366 = vld [vmem:[%s1365] sm:$0x1]
        %v1368 = vlaneseq
        %v1369 = vshrl.u32 %v1368, 7
        %v1370 = vsub.s32 0, %v1369
        %v1371 = vrot.slane %v1366, %v1370
        %v1389 = vunpack.c.l.b16 %v1349
        %v1390 = vunpack.c.l.b16 %v1350
        %v1391 = vunpack.c.l.b16 %v1351
        %v1392 = vunpack.c.l.b16 %v1352
        %v1393 = vunpack.c.l.b16 %v1353
        %v1394 = vunpack.c.l.b16 %v1354
        %v1395 = vunpack.c.l.b16 %v1355
        %v1396 = vunpack.c.l.b16 %v1356
        %v1397 = vunpack.c.l.b16 %v1357
        %v1398 = vunpack.c.l.b16 %v1358
        %v1399 = vunpack.c.l.b16 %v1359
        %v1400 = vunpack.c.l.b16 %v1360
        %v1401 = vunpack.c.l.b16 %v1361
        %v1402 = vunpack.c.l.b16 %v1362
        %v1403 = vunpack.c.l.b16 %v1363
        %v1404 = vunpack.c.l.b16 %v1364
        %v1405 = vpack.c.b16 %v1390, %v1389
        %v1406 = vpack.c.b16 %v1392, %v1391
        %v1407 = vpack.c.b16 %v1394, %v1393
        %v1408 = vpack.c.b16 %v1396, %v1395
        %v1409 = vpack.c.b16 %v1398, %v1397
        %v1410 = vpack.c.b16 %v1400, %v1399
        %v1411 = vpack.c.b16 %v1402, %v1401
        %v1412 = vpack.c.b16 %v1404, %v1403
        %1421 = vmatprep.subr.bf16.mxu0 0
        %1422 = vmatpush1.bf16.msra.mxu0 %v1405
        %1423 = vmatprep.subr.bf16.mxu0 0
        %1424 = vmatpush1.bf16.msra.mxu0 %v1406
        %1425 = vmatprep.subr.bf16.mxu0 0
        %1426 = vmatpush1.bf16.msra.mxu0 %v1407
        %1427 = vmatprep.subr.bf16.mxu0 0
        %1428 = vmatpush1.bf16.msra.mxu0 %v1408
        %1429 = vmatprep.subr.bf16.mxu0 0
        %1430 = vmatpush1.bf16.msra.mxu0 %v1409
        %1431 = vmatprep.subr.bf16.mxu0 0
        %1432 = vmatpush1.bf16.msra.mxu0 %v1410
        %1433 = vmatprep.subr.bf16.mxu0 0
        %1434 = vmatpush1.bf16.msra.mxu0 %v1411
        %1435 = vmatprep.subr.bf16.mxu0 0
        %1436 = vmatpush1.bf16.msra.mxu0 %v1412
        %1437 = vmatprep.subr.bf16.mxu0 0
        %1438 = vmatpush1.bf16.msra.mxu0 0
        %1439 = vmatprep.subr.bf16.mxu0 0
        %1440 = vmatpush1.bf16.msra.mxu0 0
        %1441 = vmatprep.subr.bf16.mxu0 0
        %1442 = vmatpush1.bf16.msra.mxu0 0
        %1443 = vmatprep.subr.bf16.mxu0 0
        %1444 = vmatpush1.bf16.msra.mxu0 0
        %1445 = vmatprep.subr.bf16.mxu0 0
        %1446 = vmatpush1.bf16.msra.mxu0 0
        %1447 = vmatprep.subr.bf16.mxu0 0
        %1448 = vmatpush1.bf16.msra.mxu0 0
        %1449 = vmatprep.subr.bf16.mxu0 0
        %1450 = vmatpush1.bf16.msra.mxu0 0
        %1451 = vmatprep.subr.bf16.mxu0 0
        %1452 = vmatpush1.bf16.msra.mxu0 0
        %1453 = vmatprep.mubr.bf16.mxu0 0
        %1454 = vmatmul.mubr.bf16.gmra.mrb[0].mxu0 %v1344
        %v1455 = vpop.f32.mrb[0].mxu0
        %v1456 = vadd.f32 %v1371, %v1455
        %v1457 = vpop.f32.mrb[0].mxu0
        %v1458 = vpop.f32.mrb[0].mxu0
        %v1459 = vadd.f32 %v1371, %v1458
        %v1460 = vpop.f32.mrb[0].mxu0
        %1461 = vmatprep.mubr.bf16.mxu0 0
        %1462 = vmatmul.mubr.bf16.gmra.mrb[0].mxu0 %v1345
        %v1463 = vpop.f32.mrb[0].mxu0
        %v1464 = vadd.f32 %v1371, %v1463
        %v1465 = vpop.f32.mrb[0].mxu0
        %v1466 = vpop.f32.mrb[0].mxu0
        %v1467 = vadd.f32 %v1371, %v1466
        %v1468 = vpop.f32.mrb[0].mxu0
        %1469 = vmatprep.mubr.bf16.mxu0 0
        %1470 = vmatmul.mubr.bf16.gmra.mrb[0].mxu0 %v1346
        %v1471 = vpop.f32.mrb[0].mxu0
        %v1472 = vadd.f32 %v1371, %v1471
        %v1473 = vpop.f32.mrb[0].mxu0
        %v1474 = vpop.f32.mrb[0].mxu0
        %v1475 = vadd.f32 %v1371, %v1474
        %v1476 = vpop.f32.mrb[0].mxu0
        %1477 = vmatprep.mubr.bf16.mxu0 0
        %1478 = vmatmul.mubr.bf16.gmra.mrb[0].mxu0 %v1347
        %v1479 = vpop.f32.mrb[0].mxu0
        %v1480 = vadd.f32 %v1371, %v1479
        %v1481 = vpop.f32.mrb[0].mxu0
        %v1482 = vpop.f32.mrb[0].mxu0
        %v1483 = vadd.f32 %v1371, %v1482
        %v1484 = vpop.f32.mrb[0].mxu0
        %1485 = vdwg.mxu0
        %v1486 = vadd.f32 %v1456, %v1178
        %v1487 = vadd.f32 %v1459, %v1179
        %v1488 = vadd.f32 %v1464, %v1180
        %v1489 = vadd.f32 %v1467, %v1181
        %v1490 = vadd.f32 %v1472, %v1182
        %v1491 = vadd.f32 %v1475, %v1183
        %v1492 = vadd.f32 %v1480, %v1184
        %v1493 = vadd.f32 %v1483, %v1185
        %v1494 = vmul.f32 %v1486, 0.1
        %v1495 = vmul.f32 %v1487, 0.1
        %v1496 = vmul.f32 %v1488, 0.1
        %v1497 = vmul.f32 %v1489, 0.1
        %v1498 = vmul.f32 %v1490, 0.1
        %v1499 = vmul.f32 %v1491, 0.1
        %v1500 = vmul.f32 %v1492, 0.1
        %v1501 = vmul.f32 %v1493, 0.1
        %v1502 = vmax.f32 %v1486, %v1494
        %v1503 = vmax.f32 %v1487, %v1495
        %v1504 = vmax.f32 %v1488, %v1496
        %v1505 = vmax.f32 %v1489, %v1497
        %v1506 = vmax.f32 %v1490, %v1498
        %v1507 = vmax.f32 %v1491, %v1499
        %v1508 = vmax.f32 %v1492, %v1500
        %v1509 = vmax.f32 %v1493, %v1501
        %v1510 = vpack.c.bf16 %v1503, %v1502
        %v1511 = vpack.c.bf16 %v1505, %v1504
        %v1512 = vpack.c.bf16 %v1507, %v1506
        %v1513 = vpack.c.bf16 %v1509, %v1508
        %v1514 = vld [vmem:[#allocation4] sm:$0xf]
        %v1515 = vld [vmem:[#allocation4 + $0x4] sm:$0xf]
        %v1516 = vld [vmem:[#allocation4 + $0x8] sm:$0xf]
        %v1517 = vld [vmem:[#allocation4 + $0xc] sm:$0xf]
        %v1518 = vld [vmem:[#allocation4 + $0x10] sm:$0xf]
        %v1519 = vld [vmem:[#allocation4 + $0x14] sm:$0xf]
        %v1520 = vld [vmem:[#allocation4 + $0x18] sm:$0xf]
        %v1521 = vld [vmem:[#allocation4 + $0x1c] sm:$0xf]
        %v1522 = vld [vmem:[#allocation4 + $0x20] sm:$0xf]
        %v1523 = vld [vmem:[#allocation4 + $0x24] sm:$0xf]
        %v1524 = vld [vmem:[#allocation4 + $0x28] sm:$0xf]
        %v1525 = vld [vmem:[#allocation4 + $0x2c] sm:$0xf]
        %v1526 = vld [vmem:[#allocation4 + $0x30] sm:$0xf]
        %v1527 = vld [vmem:[#allocation4 + $0x34] sm:$0xf]
        %v1528 = vld [vmem:[#allocation4 + $0x38] sm:$0xf]
        %v1529 = vld [vmem:[#allocation4 + $0x3c] sm:$0xf]
        %v1530 = vld [vmem:[%s8] sm:$0x1]
        %v1532 = vlaneseq
        %v1533 = vshrl.u32 %v1532, 7
        %v1534 = vsub.s32 0, %v1533
        %v1535 = vrot.slane %v1530, %v1534
        %v1553 = vunpack.c.l.b16 %v1514
        %v1554 = vunpack.c.l.b16 %v1515
        %v1555 = vunpack.c.l.b16 %v1516
        %v1556 = vunpack.c.l.b16 %v1517
        %v1557 = vunpack.c.l.b16 %v1518
        %v1558 = vunpack.c.l.b16 %v1519
        %v1559 = vunpack.c.l.b16 %v1520
        %v1560 = vunpack.c.l.b16 %v1521
        %v1561 = vunpack.c.l.b16 %v1522
        %v1562 = vunpack.c.l.b16 %v1523
        %v1563 = vunpack.c.l.b16 %v1524
        %v1564 = vunpack.c.l.b16 %v1525
        %v1565 = vunpack.c.l.b16 %v1526
        %v1566 = vunpack.c.l.b16 %v1527
        %v1567 = vunpack.c.l.b16 %v1528
        %v1568 = vunpack.c.l.b16 %v1529
        %v1569 = vpack.c.b16 %v1554, %v1553
        %v1570 = vpack.c.b16 %v1556, %v1555
        %v1571 = vpack.c.b16 %v1558, %v1557
        %v1572 = vpack.c.b16 %v1560, %v1559
        %v1573 = vpack.c.b16 %v1562, %v1561
        %v1574 = vpack.c.b16 %v1564, %v1563
        %v1575 = vpack.c.b16 %v1566, %v1565
        %v1576 = vpack.c.b16 %v1568, %v1567
        %1585 = vmatprep.subr.bf16.mxu0 0
        %1586 = vmatpush1.bf16.msra.mxu0 %v1569
        %1587 = vmatprep.subr.bf16.mxu0 0
        %1588 = vmatpush1.bf16.msra.mxu0 %v1570
        %1589 = vmatprep.subr.bf16.mxu0 0
        %1590 = vmatpush1.bf16.msra.mxu0 %v1571
        %1591 = vmatprep.subr.bf16.mxu0 0
        %1592 = vmatpush1.bf16.msra.mxu0 %v1572
        %1593 = vmatprep.subr.bf16.mxu0 0
        %1594 = vmatpush1.bf16.msra.mxu0 %v1573
        %1595 = vmatprep.subr.bf16.mxu0 0
        %1596 = vmatpush1.bf16.msra.mxu0 %v1574
        %1597 = vmatprep.subr.bf16.mxu0 0
        %1598 = vmatpush1.bf16.msra.mxu0 %v1575
        %1599 = vmatprep.subr.bf16.mxu0 0
        %1600 = vmatpush1.bf16.msra.mxu0 %v1576
        %1601 = vmatprep.subr.bf16.mxu0 0
        %1602 = vmatpush1.bf16.msra.mxu0 0
        %1603 = vmatprep.subr.bf16.mxu0 0
        %1604 = vmatpush1.bf16.msra.mxu0 0
        %1605 = vmatprep.subr.bf16.mxu0 0
        %1606 = vmatpush1.bf16.msra.mxu0 0
        %1607 = vmatprep.subr.bf16.mxu0 0
        %1608 = vmatpush1.bf16.msra.mxu0 0
        %1609 = vmatprep.subr.bf16.mxu0 0
        %1610 = vmatpush1.bf16.msra.mxu0 0
        %1611 = vmatprep.subr.bf16.mxu0 0
        %1612 = vmatpush1.bf16.msra.mxu0 0
        %1613 = vmatprep.subr.bf16.mxu0 0
        %1614 = vmatpush1.bf16.msra.mxu0 0
        %1615 = vmatprep.subr.bf16.mxu0 0
        %1616 = vmatpush1.bf16.msra.mxu0 0
        %1617 = vmatprep.mubr.bf16.mxu0 0
        %1618 = vmatmul.mubr.bf16.gmra.mrb[0].mxu0 %v1510
        %v1619 = vpop.f32.mrb[0].mxu0
        %v1620 = vadd.f32 %v1535, %v1619
        %v1621 = vpop.f32.mrb[0].mxu0
        %v1622 = vpop.f32.mrb[0].mxu0
        %v1623 = vadd.f32 %v1535, %v1622
        %v1624 = vpop.f32.mrb[0].mxu0
        %1625 = vmatprep.mubr.bf16.mxu0 0
        %1626 = vmatmul.mubr.bf16.gmra.mrb[0].mxu0 %v1511
        %v1627 = vpop.f32.mrb[0].mxu0
        %v1628 = vadd.f32 %v1535, %v1627
        %v1629 = vpop.f32.mrb[0].mxu0
        %v1630 = vpop.f32.mrb[0].mxu0
        %v1631 = vadd.f32 %v1535, %v1630
        %v1632 = vpop.f32.mrb[0].mxu0
        %1633 = vmatprep.mubr.bf16.mxu0 0
        %1634 = vmatmul.mubr.bf16.gmra.mrb[0].mxu0 %v1512
        %v1635 = vpop.f32.mrb[0].mxu0
        %v1636 = vadd.f32 %v1535, %v1635
        %v1637 = vpop.f32.mrb[0].mxu0
        %v1638 = vpop.f32.mrb[0].mxu0
        %v1639 = vadd.f32 %v1535, %v1638
        %v1640 = vpop.f32.mrb[0].mxu0
        %1641 = vmatprep.mubr.bf16.mxu0 0
        %1642 = vmatmul.mubr.bf16.gmra.mrb[0].mxu0 %v1513
        %v1643 = vpop.f32.mrb[0].mxu0
        %v1644 = vadd.f32 %v1535, %v1643
        %v1645 = vpop.f32.mrb[0].mxu0
        %v1646 = vpop.f32.mrb[0].mxu0
        %v1647 = vadd.f32 %v1535, %v1646
        %v1648 = vpop.f32.mrb[0].mxu0
        %1649 = vdwg.mxu0
        %v1650 = vmul.f32 %v1620, 0.1
        %v1651 = vmul.f32 %v1623, 0.1
        %v1652 = vmul.f32 %v1628, 0.1
        %v1653 = vmul.f32 %v1631, 0.1
        %v1654 = vmul.f32 %v1636, 0.1
        %v1655 = vmul.f32 %v1639, 0.1
        %v1656 = vmul.f32 %v1644, 0.1
        %v1657 = vmul.f32 %v1647, 0.1
        %v1658 = vmax.f32 %v1620, %v1650
        %v1659 = vmax.f32 %v1623, %v1651
        %v1660 = vmax.f32 %v1628, %v1652
        %v1661 = vmax.f32 %v1631, %v1653
        %v1662 = vmax.f32 %v1636, %v1654
        %v1663 = vmax.f32 %v1639, %v1655
        %v1664 = vmax.f32 %v1644, %v1656
        %v1665 = vmax.f32 %v1647, %v1657
        %v1666 = vpack.c.bf16 %v1659, %v1658
        %v1667 = vpack.c.bf16 %v1661, %v1660
        %v1668 = vpack.c.bf16 %v1663, %v1662
        %v1669 = vpack.c.bf16 %v1665, %v1664
        %v1670 = vld [vmem:[%s9] sm:$0xf]
        %v1671 = vld [vmem:[%s9 + $0x4] sm:$0xf]
        %v1672 = vld [vmem:[%s9 + $0x8] sm:$0xf]
        %v1673 = vld [vmem:[%s9 + $0xc] sm:$0xf]
        %v1674 = vld [vmem:[%s9 + $0x10] sm:$0xf]
        %v1675 = vld [vmem:[%s9 + $0x14] sm:$0xf]
        %v1676 = vld [vmem:[%s9 + $0x18] sm:$0xf]
        %v1677 = vld [vmem:[%s9 + $0x1c] sm:$0xf]
        %v1678 = vld [vmem:[%s9 + $0x20] sm:$0xf]
        %v1679 = vld [vmem:[%s9 + $0x24] sm:$0xf]
        %v1680 = vld [vmem:[%s9 + $0x28] sm:$0xf]
        %v1681 = vld [vmem:[%s9 + $0x2c] sm:$0xf]
        %v1682 = vld [vmem:[%s9 + $0x30] sm:$0xf]
        %v1683 = vld [vmem:[%s9 + $0x34] sm:$0xf]
        %v1684 = vld [vmem:[%s9 + $0x38] sm:$0xf]
        %v1685 = vld [vmem:[%s9 + $0x3c] sm:$0xf]
        %v1686 = vld [vmem:[%s10] sm:$0x1]
        %v1688 = vlaneseq
        %v1689 = vshrl.u32 %v1688, 7
        %v1690 = vsub.s32 0, %v1689
        %v1691 = vrot.slane %v1686, %v1690
        %v1709 = vunpack.c.l.b16 %v1670
        %v1710 = vunpack.c.l.b16 %v1671
        %v1711 = vunpack.c.l.b16 %v1672
        %v1712 = vunpack.c.l.b16 %v1673
        %v1713 = vunpack.c.l.b16 %v1674
        %v1714 = vunpack.c.l.b16 %v1675
        %v1715 = vunpack.c.l.b16 %v1676
        %v1716 = vunpack.c.l.b16 %v1677
        %v1717 = vunpack.c.l.b16 %v1678
        %v1718 = vunpack.c.l.b16 %v1679
        %v1719 = vunpack.c.l.b16 %v1680
        %v1720 = vunpack.c.l.b16 %v1681
        %v1721 = vunpack.c.l.b16 %v1682
        %v1722 = vunpack.c.l.b16 %v1683
        %v1723 = vunpack.c.l.b16 %v1684
        %v1724 = vunpack.c.l.b16 %v1685
        %v1725 = vpack.c.b16 %v1710, %v1709
        %v1726 = vpack.c.b16 %v1712, %v1711
        %v1727 = vpack.c.b16 %v1714, %v1713
        %v1728 = vpack.c.b16 %v1716, %v1715
        %v1729 = vpack.c.b16 %v1718, %v1717
        %v1730 = vpack.c.b16 %v1720, %v1719
        %v1731 = vpack.c.b16 %v1722, %v1721
        %v1732 = vpack.c.b16 %v1724, %v1723
        %1741 = vmatprep.subr.bf16.mxu0 0
        %1742 = vmatpush1.bf16.msra.mxu0 %v1725
        %1743 = vmatprep.subr.bf16.mxu0 0
        %1744 = vmatpush1.bf16.msra.mxu0 %v1726
        %1745 = vmatprep.subr.bf16.mxu0 0
        %1746 = vmatpush1.bf16.msra.mxu0 %v1727
        %1747 = vmatprep.subr.bf16.mxu0 0
        %1748 = vmatpush1.bf16.msra.mxu0 %v1728
        %1749 = vmatprep.subr.bf16.mxu0 0
        %1750 = vmatpush1.bf16.msra.mxu0 %v1729
        %1751 = vmatprep.subr.bf16.mxu0 0
        %1752 = vmatpush1.bf16.msra.mxu0 %v1730
        %1753 = vmatprep.subr.bf16.mxu0 0
        %1754 = vmatpush1.bf16.msra.mxu0 %v1731
        %1755 = vmatprep.subr.bf16.mxu0 0
        %1756 = vmatpush1.bf16.msra.mxu0 %v1732
        %1757 = vmatprep.subr.bf16.mxu0 0
        %1758 = vmatpush1.bf16.msra.mxu0 0
        %1759 = vmatprep.subr.bf16.mxu0 0
        %1760 = vmatpush1.bf16.msra.mxu0 0
        %1761 = vmatprep.subr.bf16.mxu0 0
        %1762 = vmatpush1.bf16.msra.mxu0 0
        %1763 = vmatprep.subr.bf16.mxu0 0
        %1764 = vmatpush1.bf16.msra.mxu0 0
        %1765 = vmatprep.subr.bf16.mxu0 0
        %1766 = vmatpush1.bf16.msra.mxu0 0
        %1767 = vmatprep.subr.bf16.mxu0 0
        %1768 = vmatpush1.bf16.msra.mxu0 0
        %1769 = vmatprep.subr.bf16.mxu0 0
        %1770 = vmatpush1.bf16.msra.mxu0 0
        %1771 = vmatprep.subr.bf16.mxu0 0
        %1772 = vmatpush1.bf16.msra.mxu0 0
        %1773 = vmatprep.mubr.bf16.mxu0 0
        %1774 = vmatmul.mubr.bf16.gmra.mrb[0].mxu0 %v1666
        %v1775 = vpop.f32.mrb[0].mxu0
        %v1776 = vadd.f32 %v1691, %v1775
        %v1777 = vpop.f32.mrb[0].mxu0
        %v1778 = vpop.f32.mrb[0].mxu0
        %v1779 = vadd.f32 %v1691, %v1778
        %v1780 = vpop.f32.mrb[0].mxu0
        %1781 = vmatprep.mubr.bf16.mxu0 0
        %1782 = vmatmul.mubr.bf16.gmra.mrb[0].mxu0 %v1667
        %v1783 = vpop.f32.mrb[0].mxu0
        %v1784 = vadd.f32 %v1691, %v1783
        %v1785 = vpop.f32.mrb[0].mxu0
        %v1786 = vpop.f32.mrb[0].mxu0
        %v1787 = vadd.f32 %v1691, %v1786
        %v1788 = vpop.f32.mrb[0].mxu0
        %1789 = vmatprep.mubr.bf16.mxu0 0
        %1790 = vmatmul.mubr.bf16.gmra.mrb[0].mxu0 %v1668
        %v1791 = vpop.f32.mrb[0].mxu0
        %v1792 = vadd.f32 %v1691, %v1791
        %v1793 = vpop.f32.mrb[0].mxu0
        %v1794 = vpop.f32.mrb[0].mxu0
        %v1795 = vadd.f32 %v1691, %v1794
        %v1796 = vpop.f32.mrb[0].mxu0
        %1797 = vmatprep.mubr.bf16.mxu0 0
        %1798 = vmatmul.mubr.bf16.gmra.mrb[0].mxu0 %v1669
        %v1799 = vpop.f32.mrb[0].mxu0
        %v1800 = vadd.f32 %v1691, %v1799
        %v1801 = vpop.f32.mrb[0].mxu0
        %v1802 = vpop.f32.mrb[0].mxu0
        %v1803 = vadd.f32 %v1691, %v1802
        %v1804 = vpop.f32.mrb[0].mxu0
        %1805 = vdwg.mxu0
        %v1806 = vmax.f32 %v1776, 0.0
        %v1807 = vmax.f32 %v1779, 0.0
        %v1808 = vmax.f32 %v1784, 0.0
        %v1809 = vmax.f32 %v1787, 0.0
        %v1810 = vmax.f32 %v1792, 0.0
        %v1811 = vmax.f32 %v1795, 0.0
        %v1812 = vmax.f32 %v1800, 0.0
        %v1813 = vmax.f32 %v1803, 0.0
        %vm1814 = vcmask 64512
        %1815 = vst.msk [vmem:[%s418] sm:$0xff] %vm1814, %v1806
        %1816 = vst.msk [vmem:[%s418 + $0x8] sm:$0xff] %vm1814, %v1807
        %1817 = vst.msk [vmem:[%s418 + $0x10] sm:$0xff] %vm1814, %v1808
        %1818 = vst.msk [vmem:[%s418 + $0x18] sm:$0xff] %vm1814, %v1809
        %1819 = vst.msk [vmem:[%s418 + $0x20] sm:$0xff] %vm1814, %v1810
        %1820 = vst.msk [vmem:[%s418 + $0x28] sm:$0xff] %vm1814, %v1811
        %1821 = vst.msk [vmem:[%s418 + $0x30] sm:$0xff] %vm1814, %v1812
        %1822 = vst.msk [vmem:[%s418 + $0x38] sm:$0xff] %vm1814, %v1813
        %s1823 = smul.u32 8, %s24
        %p1824 = scmp.lt.s32.totalorder %s1823, 15
        %s1825 = scalar_select %p1824, %s1823, 15
        %s1826 = smul.addr %s1825, 8
        %s1827 = scalar_lea.vmem %s11, %s1826
        // Predicated region
        $region73: #{tpu_custom_call.1} parent=63 // pred_check
          %p1828 = pneg %p278
        $region74: #{tpu_custom_call.1} parent=63 // pred_check_branch
          %1830 = sbr.rel (%p1828) target = $region76
        $region75: #{tpu_custom_call.1} parent=63 // pred_region
          %s1831 = smul.u32 8, %s24
        $region76: #{tpu_custom_call.1} parent=63 // pred_fallthru
          _
      $region64: #{tpu_custom_call.1} parent=5 // pred_fallthru
        _
      %p1832 = scmp.le.s32.totalorder 2, %s19
      // Predicated region
      $region77: #{tpu_custom_call.1} parent=5 // pred_check
        %p1833 = pneg %p1832
      $region78: #{tpu_custom_call.1} parent=5 // pred_check_branch
        %1835 = sbr.rel (%p1833) target = $region80
      $region79: #{tpu_custom_call.1} parent=5 // pred_region
        %s1836 = ssub.s32 %s19, 2
        // Predicated region
        $region81: #{tpu_custom_call.1} parent=79 // pred_check
          %p1837 = pneg %p284
        $region82: #{tpu_custom_call.1} parent=79 // pred_check_branch
          %1839 = sbr.rel (%p1837) target = $region84
        $region83: #{tpu_custom_call.1} parent=79 // pred_region
          %s1840 = smul.u32 8, %s25
          %p1841 = scmp.lt.s32.totalorder %s1840, 15
          %s1842 = scalar_select %p1841, %s1840, 15
          %s1843 = smul.addr %s1842, 8
          %s1844 = scalar_lea.vmem %s11, %s1843
        $region84: #{tpu_custom_call.1} parent=79 // pred_fallthru
          _
      $region80: #{tpu_custom_call.1} parent=5 // pred_fallthru
        _
    $region6: #{tpu_custom_call.1} parent=1 // loop_footer
      %s23 = sadd.s32 1, %s19
    $region7: #{tpu_custom_call.1} parent=1 // loop_footer_branch
      %18 = sbr.rel target = $region3
    $region8: #{tpu_custom_call.1} parent=1 // loop_exit
      _
    %1845 = vsyncpa [#allocation3], 1
    %s1846 = scalar_lea.sflag [#allocation3], 1
    %1847 = vsyncpa %s1846, 1
    %1848 = vsyncpa [#allocation5], 1

</llo_original>
